<compile_context>
chip_gen: v5e
topology: v5e:2x2
jax: 0.10.0
libtpu: 0.0.40
codegen_flags: <defaults>
</compile_context>

<pallas_src>
import functools

import jax
import jax.numpy as jnp
import numpy as np
from jax.experimental import pallas as pl
from jax.experimental.pallas import tpu as pltpu

EPS = 1e-5  # nn.GroupNorm default eps


def _residual_block_kernel(
    img_w,                      # static image width, bound via functools.partial
    x_ref, temb_ref,
    gn1_w_ref, gn1_b_ref, avg_in_ref, w1_ref, b1_ref,
    gn2_w_ref, gn2_b_ref, avg_out_ref, w2_ref, ws_ref, b2s_ref,
    mask_ref,
    out_ref,
):
    _, Cin, HW = x_ref.shape
    Cout = out_ref.shape[1]

    x = x_ref[0].astype(jnp.float32)                       # (Cin, HW), C-major

    def swish(h):
        return h * jax.nn.sigmoid(h)

    def group_norm(h, avg_ref, w_ref, b_ref):
        # h: (C, HW).  avg[c, c'] = 1/(HW * C/G) if c and c' share a group, so
        # one fused (C, C) @ (C, 2) dot yields per-channel group mean / E[x^2].
        s = jnp.sum(h, axis=1, keepdims=True)              # (C, 1)
        ss = jnp.sum(h * h, axis=1, keepdims=True)         # (C, 1)
        g = jnp.dot(avg_ref[...], jnp.concatenate([s, ss], axis=1),
                    preferred_element_type=jnp.float32)    # (C, 2)
        mean = g[:, 0:1]
        inv = jax.lax.rsqrt(g[:, 1:2] - mean * mean + EPS)
        return (h - mean) * (inv * w_ref[...]) + b_ref[...]

    def conv3x3(act, w_ref, bias, extra_w_ref=None, extra_act=None):
        # act: (C, HW) f32.  w_ref: (9, Cout, C) bf16.  Each 3x3 tap is a lane
        # roll of the flat image (circular wrap zeroed by the edge mask), so
        # the conv is 9 accumulating bf16 MXU dots with a lane-dense output --
        # no halo-padded scratch and no im2col slab stores.
        acc = jnp.zeros((Cout, HW), jnp.float32)
        for dy in range(3):
            for dx in range(3):
                j = dy * 3 + dx
                off = (dy - 1) * img_w + (dx - 1)
                if off == 0:                               # center tap: no shift
                    tap = act.astype(jnp.bfloat16)
                else:
                    rolled = pltpu.roll(act, shift=(-off) % HW, axis=1)
                    tap = (rolled * mask_ref[j:j + 1, :]).astype(jnp.bfloat16)
                acc = acc + jnp.dot(w_ref[j], tap,
                                    preferred_element_type=jnp.float32)
        if extra_w_ref is not None:   # 1x1 shortcut folded into this conv
            acc = acc + jnp.dot(extra_w_ref[...], extra_act.astype(jnp.bfloat16),
                                preferred_element_type=jnp.float32)
        return acc + bias

    # h = conv1(swish(gn1(x)))
    h = swish(group_norm(x, avg_in_ref, gn1_w_ref, gn1_b_ref))
    h = conv3x3(h, w1_ref, b1_ref[...])

    # h += time_emb(swish(t))   (precomputed per batch element in the wrapper)
    h = h + temb_ref[0]                                    # (Cout, 1) lane bcast

    # h = conv2(dropout(swish(gn2(h)))) + shortcut(x)   (shortcut folded in)
    h = swish(group_norm(h, avg_out_ref, gn2_w_ref, gn2_b_ref))
    # TODO(synk): nn.Dropout(0.1) only acts in training mode; eval identity here.
    out = conv3x3(h, w2_ref, b2s_ref[...], extra_w_ref=ws_ref, extra_act=x)

    out_ref[0] = out.astype(out_ref.dtype)                 # lane-dense store


def _group_avg_matrix(C, G, HW):
    cg = C // G
    gid = jnp.arange(C) // cg
    same = (gid[:, None] == gid[None, :]).astype(jnp.float32)
    return same / float(HW * cg)


def _tap_masks(H, W):
    # mask[j, y*W+x] = 1 iff input pixel (y+dy-1, x+dx-1) is in bounds, j=dy*3+dx
    y, x = jnp.meshgrid(jnp.arange(H), jnp.arange(W), indexing="ij")
    rows = []
    for dy in range(3):
        for dx in range(3):
            iy, ix = y + dy - 1, x + dx - 1
            ok = (iy >= 0) & (iy < H) & (ix >= 0) & (ix < W)
            rows.append(ok.reshape(-1))
    return jnp.stack(rows, axis=0).astype(jnp.float32)     # (9, H*W)


def residual_block(x_nchw, t, params, n_groups):
    B, Cin, H, W = x_nchw.shape
    Cout = params["w1"].shape[-1]
    HW = H * W

    x_flat = x_nchw.reshape(B, Cin, HW)                    # NCHW; free reshape

    # ---- cheap batched XLA-side preprocessing (outside the kernel) ----
    temb = (t * jax.nn.sigmoid(t)) @ params["tw"] + params["tb"]   # (B, Cout)
    temb = temb.reshape(B, Cout, 1)

    avg_in = _group_avg_matrix(Cin, n_groups, HW)
    avg_out = _group_avg_matrix(Cout, n_groups, HW)
    mask = _tap_masks(H, W)

    # conv weights: HWIO (3, 3, Ci, Co) -> (9, Co, Ci) bf16 MXU operands
    w1_t = jnp.transpose(params["w1"].reshape(9, Cin, Cout), (0, 2, 1)).astype(jnp.bfloat16)
    w2_t = jnp.transpose(params["w2"].reshape(9, Cout, Cout), (0, 2, 1)).astype(jnp.bfloat16)
    ws_t = params["ws"].T.astype(jnp.bfloat16)             # (Cout, Cin) shortcut

    gn1_w = params["gn1_w"].reshape(Cin, 1)
    gn1_b = params["gn1_b"].reshape(Cin, 1)
    gn2_w = params["gn2_w"].reshape(Cout, 1)
    gn2_b = params["gn2_b"].reshape(Cout, 1)
    b1 = params["b1"].reshape(Cout, 1)
    b2s = (params["b2"] + params["bs"]).reshape(Cout, 1)   # conv2 + shortcut bias

    weights = [gn1_w, gn1_b, avg_in, w1_t, b1,
               gn2_w, gn2_b, avg_out, w2_t, ws_t, b2s, mask]

    def full(a):
        return pl.BlockSpec(a.shape, lambda b, nd=a.ndim: (0,) * nd)

    # Explicit scoped-VMEM budget: double-buffered per-step blocks + weights
    # (2 buffers each) + headroom for in-kernel f32 temporaries.
    step_bytes = ((Cin + Cout) * HW + Cout) * 4
    weight_bytes = sum(int(w.size) * w.dtype.itemsize for w in weights)
    vmem_limit = int(min(64 * 1024 * 1024,
                         max(32 * 1024 * 1024,
                             2 * step_bytes + 2 * weight_bytes + (8 << 20))))

    out_flat = pl.pallas_call(
        functools.partial(_residual_block_kernel, W),
        out_shape=jax.ShapeDtypeStruct((B, Cout, HW), x_nchw.dtype),
        grid_spec=pltpu.PrefetchScalarGridSpec(
            num_scalar_prefetch=0,
            grid=(B,),
            in_specs=[pl.BlockSpec((1, Cin, HW), lambda b: (b, 0, 0)),
                      pl.BlockSpec((1, Cout, 1), lambda b: (b, 0, 0))]
                     + [full(w) for w in weights],
            out_specs=pl.BlockSpec((1, Cout, HW), lambda b: (b, 0, 0))),
        compiler_params=pltpu.CompilerParams(
            dimension_semantics=("parallel",),      # batch is data-parallel
            vmem_limit_bytes=vmem_limit),
    )(x_flat, temb, *weights)

    return out_flat.reshape(B, Cout, H, W)


# ------------------------------ pure-JAX reference ------------------------------
def reference(x_nhwc, t, p, n_groups):
    def gn(h, w, b):
        N, H, W_, C = h.shape
        hg = h.reshape(N, H, W_, n_groups, C // n_groups)
        mean = hg.mean(axis=(1, 2, 4), keepdims=True)
        var = hg.var(axis=(1, 2, 4), keepdims=True)
        hg = (hg - mean) * jax.lax.rsqrt(var + EPS)
        return hg.reshape(N, H, W_, C) * w + b

    def swish(h):
        return h * jax.nn.sigmoid(h)

    def conv(h, w, b):
        y = jax.lax.conv_general_dilated(
            h, w, window_strides=(1, 1), padding="SAME",
            dimension_numbers=("NHWC", "HWIO", "NHWC"))
        return y + b

    h = conv(swish(gn(x_nhwc, p["gn1_w"], p["gn1_b"])), p["w1"], p["b1"])
    temb = swish(t) @ p["tw"] + p["tb"]
    h = h + temb[:, None, None, :]
    h = conv(swish(gn(h, p["gn2_w"], p["gn2_b"])), p["w2"], p["b2"])
    sc = x_nhwc @ p["ws"] + p["bs"]  # 1x1 conv shortcut
    return h + sc


if __name__ == "__main__":
    B, H, W = 2, 16, 16
    Cin, Cout, Tc, G = 8, 16, 32, 4

    key = jax.random.PRNGKey(0)
    ks = jax.random.split(key, 14)

    def rnd(k, shape, scale=0.1):
        return (scale * jax.random.normal(k, shape)).astype(jnp.float32)

    params = {
        # GroupNorm(4, Cin)
        "gn1_w": (1.0 + rnd(ks[0], (1, Cin))),
        "gn1_b": rnd(ks[1], (1, Cin)),
        # Conv2d(Cin, Cout, 3x3, pad 1)  -- HWIO
        "w1": rnd(ks[2], (3, 3, Cin, Cout)),
        "b1": rnd(ks[3], (1, Cout)),
        # Linear(Tc, Cout)
        "tw": rnd(ks[4], (Tc, Cout)),
        "tb": rnd(ks[5], (1, Cout)),
        # GroupNorm(4, Cout)
        "gn2_w": (1.0 + rnd(ks[6], (1, Cout))),
        "gn2_b": rnd(ks[7], (1, Cout)),
        # Conv2d(Cout, Cout, 3x3, pad 1)
        "w2": rnd(ks[8], (3, 3, Cout, Cout)),
        "b2": rnd(ks[9], (1, Cout)),
        # shortcut Conv2d(Cin, Cout, 1x1)
        "ws": rnd(ks[10], (Cin, Cout)),
        "bs": rnd(ks[11], (1, Cout)),
    }

    x_nchw = jax.random.normal(ks[12], (B, Cin, H, W), dtype=jnp.float32)
    t = jax.random.normal(ks[13], (B, Tc), dtype=jnp.float32)

    out = residual_block(x_nchw, t, params, G)
    out = jax.block_until_ready(out)

    x_nhwc = jnp.transpose(x_nchw, (0, 2, 3, 1))
    ref_nhwc = reference(x_nhwc, t, params, G)
    ref_nchw = jnp.transpose(ref_nhwc, (0, 3, 1, 2))

    # bf16 matmul operands (f32 accumulation) -> slightly looser tolerance than
    # the all-f32 version; a structural bug would be off by O(0.1-1).
    np.testing.assert_allclose(np.asarray(out), np.asarray(ref_nchw),
                               atol=3e-2, rtol=3e-2)

    print("KERNEL_OK")
</pallas_src>

<mosaic_0001>
module attributes {stable_mosaic.version = 11 : i64} {
  func.func @_residual_block_kernel(%arg0: i32, %arg1: memref<1x8x256xf32, #tpu.memory_space<vmem>>, %arg2: memref<1x16x1xf32, #tpu.memory_space<vmem>>, %arg3: memref<8x1xf32, #tpu.memory_space<vmem>>, %arg4: memref<8x1xf32, #tpu.memory_space<vmem>>, %arg5: memref<8x8xf32, #tpu.memory_space<vmem>>, %arg6: memref<9x16x8xbf16, #tpu.memory_space<vmem>>, %arg7: memref<16x1xf32, #tpu.memory_space<vmem>>, %arg8: memref<16x1xf32, #tpu.memory_space<vmem>>, %arg9: memref<16x1xf32, #tpu.memory_space<vmem>>, %arg10: memref<16x16xf32, #tpu.memory_space<vmem>>, %arg11: memref<9x16x16xbf16, #tpu.memory_space<vmem>>, %arg12: memref<16x8xbf16, #tpu.memory_space<vmem>>, %arg13: memref<16x1xf32, #tpu.memory_space<vmem>>, %arg14: memref<9x256xf32, #tpu.memory_space<vmem>>, %arg15: memref<1x16x256xf32, #tpu.memory_space<vmem>>) attributes {dimension_semantics = [#tpu.dimension_semantics<parallel>], iteration_bounds = array<i64: 2>, scalar_prefetch = 0 : i64, scratch_operands = 0 : i64, tpu.core_type = #tpu.core_type<tc>, window_params = [{transform_indices = @transform_0, window_bounds = array<i64: 1, 8, 256>}, {transform_indices = @transform_1, window_bounds = array<i64: 1, 16, 1>}, {pipeline_mode = #tpu.pipeline_mode<synchronous>, transform_indices = @transform_2, window_bounds = array<i64: 8, 1>}, {pipeline_mode = #tpu.pipeline_mode<synchronous>, transform_indices = @transform_3, window_bounds = array<i64: 8, 1>}, {pipeline_mode = #tpu.pipeline_mode<synchronous>, transform_indices = @transform_4, window_bounds = array<i64: 8, 8>}, {pipeline_mode = #tpu.pipeline_mode<synchronous>, transform_indices = @transform_5, window_bounds = array<i64: 9, 16, 8>}, {pipeline_mode = #tpu.pipeline_mode<synchronous>, transform_indices = @transform_6, window_bounds = array<i64: 16, 1>}, {pipeline_mode = #tpu.pipeline_mode<synchronous>, transform_indices = @transform_7, window_bounds = array<i64: 16, 1>}, {pipeline_mode = #tpu.pipeline_mode<synchronous>, transform_indices = @transform_8, window_bounds = array<i64: 16, 1>}, {pipeline_mode = #tpu.pipeline_mode<synchronous>, transform_indices = @transform_9, window_bounds = array<i64: 16, 16>}, {pipeline_mode = #tpu.pipeline_mode<synchronous>, transform_indices = @transform_10, window_bounds = array<i64: 9, 16, 16>}, {pipeline_mode = #tpu.pipeline_mode<synchronous>, transform_indices = @transform_11, window_bounds = array<i64: 16, 8>}, {pipeline_mode = #tpu.pipeline_mode<synchronous>, transform_indices = @transform_12, window_bounds = array<i64: 16, 1>}, {pipeline_mode = #tpu.pipeline_mode<synchronous>, transform_indices = @transform_13, window_bounds = array<i64: 9, 256>}, {transform_indices = @transform_14, window_bounds = array<i64: 1, 16, 256>}]} {
    %c0 = arith.constant 0 : index
    %c0_0 = arith.constant 0 : index
    %c0_1 = arith.constant 0 : index
    %0 = vector.load %arg1[%c0, %c0_0, %c0_1] : memref<1x8x256xf32, #tpu.memory_space<vmem>>, vector<1x8x256xf32>
    %1 = vector.shape_cast %0 : vector<1x8x256xf32> to vector<8x256xf32>
    %cst = arith.constant dense<0.000000e+00> : vector<8xf32>
    %2 = vector.multi_reduction <add>, %1, %cst [1] : vector<8x256xf32> to vector<8xf32>
    %3 = vector.shape_cast %2 : vector<8xf32> to vector<8x1xf32>
    %4 = arith.mulf %1, %1 : vector<8x256xf32>
    %cst_2 = arith.constant dense<0.000000e+00> : vector<8xf32>
    %5 = vector.multi_reduction <add>, %4, %cst_2 [1] : vector<8x256xf32> to vector<8xf32>
    %6 = vector.shape_cast %5 : vector<8xf32> to vector<8x1xf32>
    %c0_3 = arith.constant 0 : index
    %c0_4 = arith.constant 0 : index
    %7 = vector.load %arg5[%c0_3, %c0_4] : memref<8x8xf32, #tpu.memory_space<vmem>>, vector<8x8xf32>
    %8 = tpu.concatenate %3, %6 in 1 : vector<8x1xf32>, vector<8x1xf32> -> vector<8x2xf32>
    %cst_5 = arith.constant dense<0.000000e+00> : vector<8x2xf32>
    %9 = tpu.matmul %7, %8, %cst_5 {dimension_numbers = #tpu.dot_dimension_numbers<[1], [0], [0], [1], [0, 0, 1, 1], [], []>} : vector<8x8xf32>, vector<8x2xf32>, vector<8x2xf32> -> vector<8x2xf32>
    %10 = vector.extract_strided_slice %9 {offsets = [0, 0], sizes = [8, 1], strides = [1, 1]} : vector<8x2xf32> to vector<8x1xf32>
    %11 = vector.extract_strided_slice %9 {offsets = [0, 1], sizes = [8, 1], strides = [1, 1]} : vector<8x2xf32> to vector<8x1xf32>
    %12 = arith.mulf %10, %10 : vector<8x1xf32>
    %13 = arith.subf %11, %12 : vector<8x1xf32>
    %cst_6 = arith.constant 9.99999974E-6 : f32
    %14 = vector.broadcast %cst_6 : f32 to vector<8x1xf32>
    %15 = arith.addf %13, %14 : vector<8x1xf32>
    %16 = math.rsqrt %15 : vector<8x1xf32>
    %17 = vector.broadcast %10 : vector<8x1xf32> to vector<8x256xf32>
    %18 = arith.subf %1, %17 : vector<8x256xf32>
    %c0_7 = arith.constant 0 : index
    %c0_8 = arith.constant 0 : index
    %19 = vector.load %arg3[%c0_7, %c0_8] : memref<8x1xf32, #tpu.memory_space<vmem>>, vector<8x1xf32>
    %20 = arith.mulf %16, %19 : vector<8x1xf32>
    %21 = vector.broadcast %20 : vector<8x1xf32> to vector<8x256xf32>
    %22 = arith.mulf %18, %21 : vector<8x256xf32>
    %c0_9 = arith.constant 0 : index
    %c0_10 = arith.constant 0 : index
    %23 = vector.load %arg4[%c0_9, %c0_10] : memref<8x1xf32, #tpu.memory_space<vmem>>, vector<8x1xf32>
    %24 = vector.broadcast %23 : vector<8x1xf32> to vector<8x256xf32>
    %25 = arith.addf %22, %24 : vector<8x256xf32>
    %26 = arith.negf %25 : vector<8x256xf32>
    %27 = math.exp %26 : vector<8x256xf32>
    %cst_11 = arith.constant 1.000000e+00 : f32
    %28 = vector.broadcast %cst_11 : f32 to vector<8x256xf32>
    %29 = arith.addf %28, %27 : vector<8x256xf32>
    %30 = arith.divf %28, %29 : vector<8x256xf32>
    %31 = arith.mulf %25, %30 : vector<8x256xf32>
    %c0_12 = arith.constant 0 : index
    %c0_13 = arith.constant 0 : index
    %32 = vector.load %arg7[%c0_12, %c0_13] : memref<16x1xf32, #tpu.memory_space<vmem>>, vector<16x1xf32>
    %cst_14 = arith.constant 0.000000e+00 : f32
    %33 = vector.broadcast %cst_14 : f32 to vector<16x256xf32>
    %c17_i32 = arith.constant 17 : i32
    %34 = tpu.dynamic_rotate %31 by %c17_i32 dim 1 : vector<8x256xf32>, i32 -> vector<8x256xf32>
    %c0_15 = arith.constant 0 : index
    %c0_16 = arith.constant 0 : index
    %35 = vector.load %arg14[%c0_15, %c0_16] : memref<9x256xf32, #tpu.memory_space<vmem>>, vector<1x256xf32>
    %36 = vector.broadcast %35 : vector<1x256xf32> to vector<8x256xf32>
    %37 = arith.mulf %34, %36 : vector<8x256xf32>
    %38 = arith.truncf %37 : vector<8x256xf32> to vector<8x256xbf16>
    %c0_17 = arith.constant 0 : index
    %c0_18 = arith.constant 0 : index
    %c0_19 = arith.constant 0 : index
    %39 = vector.load %arg6[%c0_17, %c0_18, %c0_19] : memref<9x16x8xbf16, #tpu.memory_space<vmem>>, vector<1x16x8xbf16>
    %40 = vector.shape_cast %39 : vector<1x16x8xbf16> to vector<16x8xbf16>
    %cst_20 = arith.constant dense<0.000000e+00> : vector<16x256xf32>
    %41 = tpu.matmul %40, %38, %cst_20 {dimension_numbers = #tpu.dot_dimension_numbers<[1], [0], [0], [1], [0, 0, 1, 1], [], []>} : vector<16x8xbf16>, vector<8x256xbf16>, vector<16x256xf32> -> vector<16x256xf32>
    %42 = arith.addf %33, %41 : vector<16x256xf32>
    %c16_i32 = arith.constant 16 : i32
    %43 = tpu.dynamic_rotate %31 by %c16_i32 dim 1 : vector<8x256xf32>, i32 -> vector<8x256xf32>
    %c1 = arith.constant 1 : index
    %c0_21 = arith.constant 0 : index
    %44 = vector.load %arg14[%c1, %c0_21] : memref<9x256xf32, #tpu.memory_space<vmem>>, vector<1x256xf32>
    %45 = vector.broadcast %44 : vector<1x256xf32> to vector<8x256xf32>
    %46 = arith.mulf %43, %45 : vector<8x256xf32>
    %47 = arith.truncf %46 : vector<8x256xf32> to vector<8x256xbf16>
    %c1_22 = arith.constant 1 : index
    %c0_23 = arith.constant 0 : index
    %c0_24 = arith.constant 0 : index
    %48 = vector.load %arg6[%c1_22, %c0_23, %c0_24] : memref<9x16x8xbf16, #tpu.memory_space<vmem>>, vector<1x16x8xbf16>
    %49 = vector.shape_cast %48 : vector<1x16x8xbf16> to vector<16x8xbf16>
    %cst_25 = arith.constant dense<0.000000e+00> : vector<16x256xf32>
    %50 = tpu.matmul %49, %47, %cst_25 {dimension_numbers = #tpu.dot_dimension_numbers<[1], [0], [0], [1], [0, 0, 1, 1], [], []>} : vector<16x8xbf16>, vector<8x256xbf16>, vector<16x256xf32> -> vector<16x256xf32>
    %51 = arith.addf %42, %50 : vector<16x256xf32>
    %c15_i32 = arith.constant 15 : i32
    %52 = tpu.dynamic_rotate %31 by %c15_i32 dim 1 : vector<8x256xf32>, i32 -> vector<8x256xf32>
    %c2 = arith.constant 2 : index
    %c0_26 = arith.constant 0 : index
    %53 = vector.load %arg14[%c2, %c0_26] : memref<9x256xf32, #tpu.memory_space<vmem>>, vector<1x256xf32>
    %54 = vector.broadcast %53 : vector<1x256xf32> to vector<8x256xf32>
    %55 = arith.mulf %52, %54 : vector<8x256xf32>
    %56 = arith.truncf %55 : vector<8x256xf32> to vector<8x256xbf16>
    %c2_27 = arith.constant 2 : index
    %c0_28 = arith.constant 0 : index
    %c0_29 = arith.constant 0 : index
    %57 = vector.load %arg6[%c2_27, %c0_28, %c0_29] : memref<9x16x8xbf16, #tpu.memory_space<vmem>>, vector<1x16x8xbf16>
    %58 = vector.shape_cast %57 : vector<1x16x8xbf16> to vector<16x8xbf16>
    %cst_30 = arith.constant dense<0.000000e+00> : vector<16x256xf32>
    %59 = tpu.matmul %58, %56, %cst_30 {dimension_numbers = #tpu.dot_dimension_numbers<[1], [0], [0], [1], [0, 0, 1, 1], [], []>} : vector<16x8xbf16>, vector<8x256xbf16>, vector<16x256xf32> -> vector<16x256xf32>
    %60 = arith.addf %51, %59 : vector<16x256xf32>
    %c1_i32 = arith.constant 1 : i32
    %61 = tpu.dynamic_rotate %31 by %c1_i32 dim 1 : vector<8x256xf32>, i32 -> vector<8x256xf32>
    %c3 = arith.constant 3 : index
    %c0_31 = arith.constant 0 : index
    %62 = vector.load %arg14[%c3, %c0_31] : memref<9x256xf32, #tpu.memory_space<vmem>>, vector<1x256xf32>
    %63 = vector.broadcast %62 : vector<1x256xf32> to vector<8x256xf32>
    %64 = arith.mulf %61, %63 : vector<8x256xf32>
    %65 = arith.truncf %64 : vector<8x256xf32> to vector<8x256xbf16>
    %c3_32 = arith.constant 3 : index
    %c0_33 = arith.constant 0 : index
    %c0_34 = arith.constant 0 : index
    %66 = vector.load %arg6[%c3_32, %c0_33, %c0_34] : memref<9x16x8xbf16, #tpu.memory_space<vmem>>, vector<1x16x8xbf16>
    %67 = vector.shape_cast %66 : vector<1x16x8xbf16> to vector<16x8xbf16>
    %cst_35 = arith.constant dense<0.000000e+00> : vector<16x256xf32>
    %68 = tpu.matmul %67, %65, %cst_35 {dimension_numbers = #tpu.dot_dimension_numbers<[1], [0], [0], [1], [0, 0, 1, 1], [], []>} : vector<16x8xbf16>, vector<8x256xbf16>, vector<16x256xf32> -> vector<16x256xf32>
    %69 = arith.addf %60, %68 : vector<16x256xf32>
    %70 = arith.truncf %31 : vector<8x256xf32> to vector<8x256xbf16>
    %c4 = arith.constant 4 : index
    %c0_36 = arith.constant 0 : index
    %c0_37 = arith.constant 0 : index
    %71 = vector.load %arg6[%c4, %c0_36, %c0_37] : memref<9x16x8xbf16, #tpu.memory_space<vmem>>, vector<1x16x8xbf16>
    %72 = vector.shape_cast %71 : vector<1x16x8xbf16> to vector<16x8xbf16>
    %cst_38 = arith.constant dense<0.000000e+00> : vector<16x256xf32>
    %73 = tpu.matmul %72, %70, %cst_38 {dimension_numbers = #tpu.dot_dimension_numbers<[1], [0], [0], [1], [0, 0, 1, 1], [], []>} : vector<16x8xbf16>, vector<8x256xbf16>, vector<16x256xf32> -> vector<16x256xf32>
    %74 = arith.addf %69, %73 : vector<16x256xf32>
    %c255_i32 = arith.constant 255 : i32
    %75 = tpu.dynamic_rotate %31 by %c255_i32 dim 1 : vector<8x256xf32>, i32 -> vector<8x256xf32>
    %c5 = arith.constant 5 : index
    %c0_39 = arith.constant 0 : index
    %76 = vector.load %arg14[%c5, %c0_39] : memref<9x256xf32, #tpu.memory_space<vmem>>, vector<1x256xf32>
    %77 = vector.broadcast %76 : vector<1x256xf32> to vector<8x256xf32>
    %78 = arith.mulf %75, %77 : vector<8x256xf32>
    %79 = arith.truncf %78 : vector<8x256xf32> to vector<8x256xbf16>
    %c5_40 = arith.constant 5 : index
    %c0_41 = arith.constant 0 : index
    %c0_42 = arith.constant 0 : index
    %80 = vector.load %arg6[%c5_40, %c0_41, %c0_42] : memref<9x16x8xbf16, #tpu.memory_space<vmem>>, vector<1x16x8xbf16>
    %81 = vector.shape_cast %80 : vector<1x16x8xbf16> to vector<16x8xbf16>
    %cst_43 = arith.constant dense<0.000000e+00> : vector<16x256xf32>
    %82 = tpu.matmul %81, %79, %cst_43 {dimension_numbers = #tpu.dot_dimension_numbers<[1], [0], [0], [1], [0, 0, 1, 1], [], []>} : vector<16x8xbf16>, vector<8x256xbf16>, vector<16x256xf32> -> vector<16x256xf32>
    %83 = arith.addf %74, %82 : vector<16x256xf32>
    %c241_i32 = arith.constant 241 : i32
    %84 = tpu.dynamic_rotate %31 by %c241_i32 dim 1 : vector<8x256xf32>, i32 -> vector<8x256xf32>
    %c6 = arith.constant 6 : index
    %c0_44 = arith.constant 0 : index
    %85 = vector.load %arg14[%c6, %c0_44] : memref<9x256xf32, #tpu.memory_space<vmem>>, vector<1x256xf32>
    %86 = vector.broadcast %85 : vector<1x256xf32> to vector<8x256xf32>
    %87 = arith.mulf %84, %86 : vector<8x256xf32>
    %88 = arith.truncf %87 : vector<8x256xf32> to vector<8x256xbf16>
    %c6_45 = arith.constant 6 : index
    %c0_46 = arith.constant 0 : index
    %c0_47 = arith.constant 0 : index
    %89 = vector.load %arg6[%c6_45, %c0_46, %c0_47] : memref<9x16x8xbf16, #tpu.memory_space<vmem>>, vector<1x16x8xbf16>
    %90 = vector.shape_cast %89 : vector<1x16x8xbf16> to vector<16x8xbf16>
    %cst_48 = arith.constant dense<0.000000e+00> : vector<16x256xf32>
    %91 = tpu.matmul %90, %88, %cst_48 {dimension_numbers = #tpu.dot_dimension_numbers<[1], [0], [0], [1], [0, 0, 1, 1], [], []>} : vector<16x8xbf16>, vector<8x256xbf16>, vector<16x256xf32> -> vector<16x256xf32>
    %92 = arith.addf %83, %91 : vector<16x256xf32>
    %c240_i32 = arith.constant 240 : i32
    %93 = tpu.dynamic_rotate %31 by %c240_i32 dim 1 : vector<8x256xf32>, i32 -> vector<8x256xf32>
    %c7 = arith.constant 7 : index
    %c0_49 = arith.constant 0 : index
    %94 = vector.load %arg14[%c7, %c0_49] : memref<9x256xf32, #tpu.memory_space<vmem>>, vector<1x256xf32>
    %95 = vector.broadcast %94 : vector<1x256xf32> to vector<8x256xf32>
    %96 = arith.mulf %93, %95 : vector<8x256xf32>
    %97 = arith.truncf %96 : vector<8x256xf32> to vector<8x256xbf16>
    %c7_50 = arith.constant 7 : index
    %c0_51 = arith.constant 0 : index
    %c0_52 = arith.constant 0 : index
    %98 = vector.load %arg6[%c7_50, %c0_51, %c0_52] : memref<9x16x8xbf16, #tpu.memory_space<vmem>>, vector<1x16x8xbf16>
    %99 = vector.shape_cast %98 : vector<1x16x8xbf16> to vector<16x8xbf16>
    %cst_53 = arith.constant dense<0.000000e+00> : vector<16x256xf32>
    %100 = tpu.matmul %99, %97, %cst_53 {dimension_numbers = #tpu.dot_dimension_numbers<[1], [0], [0], [1], [0, 0, 1, 1], [], []>} : vector<16x8xbf16>, vector<8x256xbf16>, vector<16x256xf32> -> vector<16x256xf32>
    %101 = arith.addf %92, %100 : vector<16x256xf32>
    %c239_i32 = arith.constant 239 : i32
    %102 = tpu.dynamic_rotate %31 by %c239_i32 dim 1 : vector<8x256xf32>, i32 -> vector<8x256xf32>
    %c8 = arith.constant 8 : index
    %c0_54 = arith.constant 0 : index
    %103 = vector.load %arg14[%c8, %c0_54] : memref<9x256xf32, #tpu.memory_space<vmem>>, vector<1x256xf32>
    %104 = vector.broadcast %103 : vector<1x256xf32> to vector<8x256xf32>
    %105 = arith.mulf %102, %104 : vector<8x256xf32>
    %106 = arith.truncf %105 : vector<8x256xf32> to vector<8x256xbf16>
    %c8_55 = arith.constant 8 : index
    %c0_56 = arith.constant 0 : index
    %c0_57 = arith.constant 0 : index
    %107 = vector.load %arg6[%c8_55, %c0_56, %c0_57] : memref<9x16x8xbf16, #tpu.memory_space<vmem>>, vector<1x16x8xbf16>
    %108 = vector.shape_cast %107 : vector<1x16x8xbf16> to vector<16x8xbf16>
    %cst_58 = arith.constant dense<0.000000e+00> : vector<16x256xf32>
    %109 = tpu.matmul %108, %106, %cst_58 {dimension_numbers = #tpu.dot_dimension_numbers<[1], [0], [0], [1], [0, 0, 1, 1], [], []>} : vector<16x8xbf16>, vector<8x256xbf16>, vector<16x256xf32> -> vector<16x256xf32>
    %110 = arith.addf %101, %109 : vector<16x256xf32>
    %111 = vector.broadcast %32 : vector<16x1xf32> to vector<16x256xf32>
    %112 = arith.addf %110, %111 : vector<16x256xf32>
    %c0_59 = arith.constant 0 : index
    %c0_60 = arith.constant 0 : index
    %c0_61 = arith.constant 0 : index
    %113 = vector.load %arg2[%c0_59, %c0_60, %c0_61] : memref<1x16x1xf32, #tpu.memory_space<vmem>>, vector<1x16x1xf32>
    %114 = vector.shape_cast %113 : vector<1x16x1xf32> to vector<16x1xf32>
    %115 = vector.broadcast %114 : vector<16x1xf32> to vector<16x256xf32>
    %116 = arith.addf %112, %115 : vector<16x256xf32>
    %cst_62 = arith.constant dense<0.000000e+00> : vector<16xf32>
    %117 = vector.multi_reduction <add>, %116, %cst_62 [1] : vector<16x256xf32> to vector<16xf32>
    %118 = vector.shape_cast %117 : vector<16xf32> to vector<16x1xf32>
    %119 = arith.mulf %116, %116 : vector<16x256xf32>
    %cst_63 = arith.constant dense<0.000000e+00> : vector<16xf32>
    %120 = vector.multi_reduction <add>, %119, %cst_63 [1] : vector<16x256xf32> to vector<16xf32>
    %121 = vector.shape_cast %120 : vector<16xf32> to vector<16x1xf32>
    %c0_64 = arith.constant 0 : index
    %c0_65 = arith.constant 0 : index
    %122 = vector.load %arg10[%c0_64, %c0_65] : memref<16x16xf32, #tpu.memory_space<vmem>>, vector<16x16xf32>
    %123 = tpu.concatenate %118, %121 in 1 : vector<16x1xf32>, vector<16x1xf32> -> vector<16x2xf32>
    %cst_66 = arith.constant dense<0.000000e+00> : vector<16x2xf32>
    %124 = tpu.matmul %122, %123, %cst_66 {dimension_numbers = #tpu.dot_dimension_numbers<[1], [0], [0], [1], [0, 0, 1, 1], [], []>} : vector<16x16xf32>, vector<16x2xf32>, vector<16x2xf32> -> vector<16x2xf32>
    %125 = vector.extract_strided_slice %124 {offsets = [0, 0], sizes = [16, 1], strides = [1, 1]} : vector<16x2xf32> to vector<16x1xf32>
    %126 = vector.extract_strided_slice %124 {offsets = [0, 1], sizes = [16, 1], strides = [1, 1]} : vector<16x2xf32> to vector<16x1xf32>
    %127 = arith.mulf %125, %125 : vector<16x1xf32>
    %128 = arith.subf %126, %127 : vector<16x1xf32>
    %cst_67 = arith.constant 9.99999974E-6 : f32
    %129 = vector.broadcast %cst_67 : f32 to vector<16x1xf32>
    %130 = arith.addf %128, %129 : vector<16x1xf32>
    %131 = math.rsqrt %130 : vector<16x1xf32>
    %132 = vector.broadcast %125 : vector<16x1xf32> to vector<16x256xf32>
    %133 = arith.subf %116, %132 : vector<16x256xf32>
    %c0_68 = arith.constant 0 : index
    %c0_69 = arith.constant 0 : index
    %134 = vector.load %arg8[%c0_68, %c0_69] : memref<16x1xf32, #tpu.memory_space<vmem>>, vector<16x1xf32>
    %135 = arith.mulf %131, %134 : vector<16x1xf32>
    %136 = vector.broadcast %135 : vector<16x1xf32> to vector<16x256xf32>
    %137 = arith.mulf %133, %136 : vector<16x256xf32>
    %c0_70 = arith.constant 0 : index
    %c0_71 = arith.constant 0 : index
    %138 = vector.load %arg9[%c0_70, %c0_71] : memref<16x1xf32, #tpu.memory_space<vmem>>, vector<16x1xf32>
    %139 = vector.broadcast %138 : vector<16x1xf32> to vector<16x256xf32>
    %140 = arith.addf %137, %139 : vector<16x256xf32>
    %141 = arith.negf %140 : vector<16x256xf32>
    %142 = math.exp %141 : vector<16x256xf32>
    %cst_72 = arith.constant 1.000000e+00 : f32
    %143 = vector.broadcast %cst_72 : f32 to vector<16x256xf32>
    %144 = arith.addf %143, %142 : vector<16x256xf32>
    %145 = arith.divf %143, %144 : vector<16x256xf32>
    %146 = arith.mulf %140, %145 : vector<16x256xf32>
    %c0_73 = arith.constant 0 : index
    %c0_74 = arith.constant 0 : index
    %147 = vector.load %arg13[%c0_73, %c0_74] : memref<16x1xf32, #tpu.memory_space<vmem>>, vector<16x1xf32>
    %cst_75 = arith.constant 0.000000e+00 : f32
    %148 = vector.broadcast %cst_75 : f32 to vector<16x256xf32>
    %c17_i32_76 = arith.constant 17 : i32
    %149 = tpu.dynamic_rotate %146 by %c17_i32_76 dim 1 : vector<16x256xf32>, i32 -> vector<16x256xf32>
    %c0_77 = arith.constant 0 : index
    %c0_78 = arith.constant 0 : index
    %150 = vector.load %arg14[%c0_77, %c0_78] : memref<9x256xf32, #tpu.memory_space<vmem>>, vector<1x256xf32>
    %151 = vector.broadcast %150 : vector<1x256xf32> to vector<16x256xf32>
    %152 = arith.mulf %149, %151 : vector<16x256xf32>
    %153 = arith.truncf %152 : vector<16x256xf32> to vector<16x256xbf16>
    %c0_79 = arith.constant 0 : index
    %c0_80 = arith.constant 0 : index
    %c0_81 = arith.constant 0 : index
    %154 = vector.load %arg11[%c0_79, %c0_80, %c0_81] : memref<9x16x16xbf16, #tpu.memory_space<vmem>>, vector<1x16x16xbf16>
    %155 = vector.shape_cast %154 : vector<1x16x16xbf16> to vector<16x16xbf16>
    %cst_82 = arith.constant dense<0.000000e+00> : vector<16x256xf32>
    %156 = tpu.matmul %155, %153, %cst_82 {dimension_numbers = #tpu.dot_dimension_numbers<[1], [0], [0], [1], [0, 0, 1, 1], [], []>} : vector<16x16xbf16>, vector<16x256xbf16>, vector<16x256xf32> -> vector<16x256xf32>
    %157 = arith.addf %148, %156 : vector<16x256xf32>
    %c16_i32_83 = arith.constant 16 : i32
    %158 = tpu.dynamic_rotate %146 by %c16_i32_83 dim 1 : vector<16x256xf32>, i32 -> vector<16x256xf32>
    %c1_84 = arith.constant 1 : index
    %c0_85 = arith.constant 0 : index
    %159 = vector.load %arg14[%c1_84, %c0_85] : memref<9x256xf32, #tpu.memory_space<vmem>>, vector<1x256xf32>
    %160 = vector.broadcast %159 : vector<1x256xf32> to vector<16x256xf32>
    %161 = arith.mulf %158, %160 : vector<16x256xf32>
    %162 = arith.truncf %161 : vector<16x256xf32> to vector<16x256xbf16>
    %c1_86 = arith.constant 1 : index
    %c0_87 = arith.constant 0 : index
    %c0_88 = arith.constant 0 : index
    %163 = vector.load %arg11[%c1_86, %c0_87, %c0_88] : memref<9x16x16xbf16, #tpu.memory_space<vmem>>, vector<1x16x16xbf16>
    %164 = vector.shape_cast %163 : vector<1x16x16xbf16> to vector<16x16xbf16>
    %cst_89 = arith.constant dense<0.000000e+00> : vector<16x256xf32>
    %165 = tpu.matmul %164, %162, %cst_89 {dimension_numbers = #tpu.dot_dimension_numbers<[1], [0], [0], [1], [0, 0, 1, 1], [], []>} : vector<16x16xbf16>, vector<16x256xbf16>, vector<16x256xf32> -> vector<16x256xf32>
    %166 = arith.addf %157, %165 : vector<16x256xf32>
    %c15_i32_90 = arith.constant 15 : i32
    %167 = tpu.dynamic_rotate %146 by %c15_i32_90 dim 1 : vector<16x256xf32>, i32 -> vector<16x256xf32>
    %c2_91 = arith.constant 2 : index
    %c0_92 = arith.constant 0 : index
    %168 = vector.load %arg14[%c2_91, %c0_92] : memref<9x256xf32, #tpu.memory_space<vmem>>, vector<1x256xf32>
    %169 = vector.broadcast %168 : vector<1x256xf32> to vector<16x256xf32>
    %170 = arith.mulf %167, %169 : vector<16x256xf32>
    %171 = arith.truncf %170 : vector<16x256xf32> to vector<16x256xbf16>
    %c2_93 = arith.constant 2 : index
    %c0_94 = arith.constant 0 : index
    %c0_95 = arith.constant 0 : index
    %172 = vector.load %arg11[%c2_93, %c0_94, %c0_95] : memref<9x16x16xbf16, #tpu.memory_space<vmem>>, vector<1x16x16xbf16>
    %173 = vector.shape_cast %172 : vector<1x16x16xbf16> to vector<16x16xbf16>
    %cst_96 = arith.constant dense<0.000000e+00> : vector<16x256xf32>
    %174 = tpu.matmul %173, %171, %cst_96 {dimension_numbers = #tpu.dot_dimension_numbers<[1], [0], [0], [1], [0, 0, 1, 1], [], []>} : vector<16x16xbf16>, vector<16x256xbf16>, vector<16x256xf32> -> vector<16x256xf32>
    %175 = arith.addf %166, %174 : vector<16x256xf32>
    %c1_i32_97 = arith.constant 1 : i32
    %176 = tpu.dynamic_rotate %146 by %c1_i32_97 dim 1 : vector<16x256xf32>, i32 -> vector<16x256xf32>
    %c3_98 = arith.constant 3 : index
    %c0_99 = arith.constant 0 : index
    %177 = vector.load %arg14[%c3_98, %c0_99] : memref<9x256xf32, #tpu.memory_space<vmem>>, vector<1x256xf32>
    %178 = vector.broadcast %177 : vector<1x256xf32> to vector<16x256xf32>
    %179 = arith.mulf %176, %178 : vector<16x256xf32>
    %180 = arith.truncf %179 : vector<16x256xf32> to vector<16x256xbf16>
    %c3_100 = arith.constant 3 : index
    %c0_101 = arith.constant 0 : index
    %c0_102 = arith.constant 0 : index
    %181 = vector.load %arg11[%c3_100, %c0_101, %c0_102] : memref<9x16x16xbf16, #tpu.memory_space<vmem>>, vector<1x16x16xbf16>
    %182 = vector.shape_cast %181 : vector<1x16x16xbf16> to vector<16x16xbf16>
    %cst_103 = arith.constant dense<0.000000e+00> : vector<16x256xf32>
    %183 = tpu.matmul %182, %180, %cst_103 {dimension_numbers = #tpu.dot_dimension_numbers<[1], [0], [0], [1], [0, 0, 1, 1], [], []>} : vector<16x16xbf16>, vector<16x256xbf16>, vector<16x256xf32> -> vector<16x256xf32>
    %184 = arith.addf %175, %183 : vector<16x256xf32>
    %185 = arith.truncf %146 : vector<16x256xf32> to vector<16x256xbf16>
    %c4_104 = arith.constant 4 : index
    %c0_105 = arith.constant 0 : index
    %c0_106 = arith.constant 0 : index
    %186 = vector.load %arg11[%c4_104, %c0_105, %c0_106] : memref<9x16x16xbf16, #tpu.memory_space<vmem>>, vector<1x16x16xbf16>
    %187 = vector.shape_cast %186 : vector<1x16x16xbf16> to vector<16x16xbf16>
    %cst_107 = arith.constant dense<0.000000e+00> : vector<16x256xf32>
    %188 = tpu.matmul %187, %185, %cst_107 {dimension_numbers = #tpu.dot_dimension_numbers<[1], [0], [0], [1], [0, 0, 1, 1], [], []>} : vector<16x16xbf16>, vector<16x256xbf16>, vector<16x256xf32> -> vector<16x256xf32>
    %189 = arith.addf %184, %188 : vector<16x256xf32>
    %c255_i32_108 = arith.constant 255 : i32
    %190 = tpu.dynamic_rotate %146 by %c255_i32_108 dim 1 : vector<16x256xf32>, i32 -> vector<16x256xf32>
    %c5_109 = arith.constant 5 : index
    %c0_110 = arith.constant 0 : index
    %191 = vector.load %arg14[%c5_109, %c0_110] : memref<9x256xf32, #tpu.memory_space<vmem>>, vector<1x256xf32>
    %192 = vector.broadcast %191 : vector<1x256xf32> to vector<16x256xf32>
    %193 = arith.mulf %190, %192 : vector<16x256xf32>
    %194 = arith.truncf %193 : vector<16x256xf32> to vector<16x256xbf16>
    %c5_111 = arith.constant 5 : index
    %c0_112 = arith.constant 0 : index
    %c0_113 = arith.constant 0 : index
    %195 = vector.load %arg11[%c5_111, %c0_112, %c0_113] : memref<9x16x16xbf16, #tpu.memory_space<vmem>>, vector<1x16x16xbf16>
    %196 = vector.shape_cast %195 : vector<1x16x16xbf16> to vector<16x16xbf16>
    %cst_114 = arith.constant dense<0.000000e+00> : vector<16x256xf32>
    %197 = tpu.matmul %196, %194, %cst_114 {dimension_numbers = #tpu.dot_dimension_numbers<[1], [0], [0], [1], [0, 0, 1, 1], [], []>} : vector<16x16xbf16>, vector<16x256xbf16>, vector<16x256xf32> -> vector<16x256xf32>
    %198 = arith.addf %189, %197 : vector<16x256xf32>
    %c241_i32_115 = arith.constant 241 : i32
    %199 = tpu.dynamic_rotate %146 by %c241_i32_115 dim 1 : vector<16x256xf32>, i32 -> vector<16x256xf32>
    %c6_116 = arith.constant 6 : index
    %c0_117 = arith.constant 0 : index
    %200 = vector.load %arg14[%c6_116, %c0_117] : memref<9x256xf32, #tpu.memory_space<vmem>>, vector<1x256xf32>
    %201 = vector.broadcast %200 : vector<1x256xf32> to vector<16x256xf32>
    %202 = arith.mulf %199, %201 : vector<16x256xf32>
    %203 = arith.truncf %202 : vector<16x256xf32> to vector<16x256xbf16>
    %c6_118 = arith.constant 6 : index
    %c0_119 = arith.constant 0 : index
    %c0_120 = arith.constant 0 : index
    %204 = vector.load %arg11[%c6_118, %c0_119, %c0_120] : memref<9x16x16xbf16, #tpu.memory_space<vmem>>, vector<1x16x16xbf16>
    %205 = vector.shape_cast %204 : vector<1x16x16xbf16> to vector<16x16xbf16>
    %cst_121 = arith.constant dense<0.000000e+00> : vector<16x256xf32>
    %206 = tpu.matmul %205, %203, %cst_121 {dimension_numbers = #tpu.dot_dimension_numbers<[1], [0], [0], [1], [0, 0, 1, 1], [], []>} : vector<16x16xbf16>, vector<16x256xbf16>, vector<16x256xf32> -> vector<16x256xf32>
    %207 = arith.addf %198, %206 : vector<16x256xf32>
    %c240_i32_122 = arith.constant 240 : i32
    %208 = tpu.dynamic_rotate %146 by %c240_i32_122 dim 1 : vector<16x256xf32>, i32 -> vector<16x256xf32>
    %c7_123 = arith.constant 7 : index
    %c0_124 = arith.constant 0 : index
    %209 = vector.load %arg14[%c7_123, %c0_124] : memref<9x256xf32, #tpu.memory_space<vmem>>, vector<1x256xf32>
    %210 = vector.broadcast %209 : vector<1x256xf32> to vector<16x256xf32>
    %211 = arith.mulf %208, %210 : vector<16x256xf32>
    %212 = arith.truncf %211 : vector<16x256xf32> to vector<16x256xbf16>
    %c7_125 = arith.constant 7 : index
    %c0_126 = arith.constant 0 : index
    %c0_127 = arith.constant 0 : index
    %213 = vector.load %arg11[%c7_125, %c0_126, %c0_127] : memref<9x16x16xbf16, #tpu.memory_space<vmem>>, vector<1x16x16xbf16>
    %214 = vector.shape_cast %213 : vector<1x16x16xbf16> to vector<16x16xbf16>
    %cst_128 = arith.constant dense<0.000000e+00> : vector<16x256xf32>
    %215 = tpu.matmul %214, %212, %cst_128 {dimension_numbers = #tpu.dot_dimension_numbers<[1], [0], [0], [1], [0, 0, 1, 1], [], []>} : vector<16x16xbf16>, vector<16x256xbf16>, vector<16x256xf32> -> vector<16x256xf32>
    %216 = arith.addf %207, %215 : vector<16x256xf32>
    %c239_i32_129 = arith.constant 239 : i32
    %217 = tpu.dynamic_rotate %146 by %c239_i32_129 dim 1 : vector<16x256xf32>, i32 -> vector<16x256xf32>
    %c8_130 = arith.constant 8 : index
    %c0_131 = arith.constant 0 : index
    %218 = vector.load %arg14[%c8_130, %c0_131] : memref<9x256xf32, #tpu.memory_space<vmem>>, vector<1x256xf32>
    %219 = vector.broadcast %218 : vector<1x256xf32> to vector<16x256xf32>
    %220 = arith.mulf %217, %219 : vector<16x256xf32>
    %221 = arith.truncf %220 : vector<16x256xf32> to vector<16x256xbf16>
    %c8_132 = arith.constant 8 : index
    %c0_133 = arith.constant 0 : index
    %c0_134 = arith.constant 0 : index
    %222 = vector.load %arg11[%c8_132, %c0_133, %c0_134] : memref<9x16x16xbf16, #tpu.memory_space<vmem>>, vector<1x16x16xbf16>
    %223 = vector.shape_cast %222 : vector<1x16x16xbf16> to vector<16x16xbf16>
    %cst_135 = arith.constant dense<0.000000e+00> : vector<16x256xf32>
    %224 = tpu.matmul %223, %221, %cst_135 {dimension_numbers = #tpu.dot_dimension_numbers<[1], [0], [0], [1], [0, 0, 1, 1], [], []>} : vector<16x16xbf16>, vector<16x256xbf16>, vector<16x256xf32> -> vector<16x256xf32>
    %225 = arith.addf %216, %224 : vector<16x256xf32>
    %c0_136 = arith.constant 0 : index
    %c0_137 = arith.constant 0 : index
    %226 = vector.load %arg12[%c0_136, %c0_137] : memref<16x8xbf16, #tpu.memory_space<vmem>>, vector<16x8xbf16>
    %227 = arith.truncf %1 : vector<8x256xf32> to vector<8x256xbf16>
    %cst_138 = arith.constant dense<0.000000e+00> : vector<16x256xf32>
    %228 = tpu.matmul %226, %227, %cst_138 {dimension_numbers = #tpu.dot_dimension_numbers<[1], [0], [0], [1], [0, 0, 1, 1], [], []>} : vector<16x8xbf16>, vector<8x256xbf16>, vector<16x256xf32> -> vector<16x256xf32>
    %229 = arith.addf %225, %228 : vector<16x256xf32>
    %230 = vector.broadcast %147 : vector<16x1xf32> to vector<16x256xf32>
    %231 = arith.addf %229, %230 : vector<16x256xf32>
    %c0_139 = arith.constant 0 : index
    %c0_140 = arith.constant 0 : index
    %c0_141 = arith.constant 0 : index
    %232 = vector.load %arg15[%c0_139, %c0_140, %c0_141] : memref<1x16x256xf32, #tpu.memory_space<vmem>>, vector<1x16x256xf32>
    %233 = vector.shape_cast %232 : vector<1x16x256xf32> to vector<16x256xf32>
    %234 = vector.shape_cast %231 : vector<16x256xf32> to vector<1x16x256xf32>
    tpu.vector_store %arg15[%c0_139, %c0_140, %c0_141], %234 {strides = array<i32>} : memref<1x16x256xf32, #tpu.memory_space<vmem>>, vector<1x16x256xf32>,
    return
  }
  func.func @transform_0(%arg0: i32) -> (i32, i32, i32) {
    %c0_i32 = arith.constant 0 : i32
    %c0_i32_0 = arith.constant 0 : i32
    %c0_i32_1 = arith.constant 0 : i32
    return %arg0, %c0_i32, %c0_i32_0 : i32, i32, i32
  }
  func.func @transform_1(%arg0: i32) -> (i32, i32, i32) {
    %c0_i32 = arith.constant 0 : i32
    %c0_i32_0 = arith.constant 0 : i32
    %c0_i32_1 = arith.constant 0 : i32
    return %arg0, %c0_i32, %c0_i32_0 : i32, i32, i32
  }
  func.func @transform_2(%arg0: i32) -> (i32, i32) {
    %c0_i32 = arith.constant 0 : i32
    %c0_i32_0 = arith.constant 0 : i32
    %c0_i32_1 = arith.constant 0 : i32
    return %c0_i32, %c0_i32_0 : i32, i32
  }
  func.func @transform_3(%arg0: i32) -> (i32, i32) {
    %c0_i32 = arith.constant 0 : i32
    %c0_i32_0 = arith.constant 0 : i32
    %c0_i32_1 = arith.constant 0 : i32
    return %c0_i32, %c0_i32_0 : i32, i32
  }
  func.func @transform_4(%arg0: i32) -> (i32, i32) {
    %c0_i32 = arith.constant 0 : i32
    %c0_i32_0 = arith.constant 0 : i32
    %c0_i32_1 = arith.constant 0 : i32
    return %c0_i32, %c0_i32_0 : i32, i32
  }
  func.func @transform_5(%arg0: i32) -> (i32, i32, i32) {
    %c0_i32 = arith.constant 0 : i32
    %c0_i32_0 = arith.constant 0 : i32
    %c0_i32_1 = arith.constant 0 : i32
    %c0_i32_2 = arith.constant 0 : i32
    return %c0_i32, %c0_i32_0, %c0_i32_1 : i32, i32, i32
  }
  func.func @transform_6(%arg0: i32) -> (i32, i32) {
    %c0_i32 = arith.constant 0 : i32
    %c0_i32_0 = arith.constant 0 : i32
    %c0_i32_1 = arith.constant 0 : i32
    return %c0_i32, %c0_i32_0 : i32, i32
  }
  func.func @transform_7(%arg0: i32) -> (i32, i32) {
    %c0_i32 = arith.constant 0 : i32
    %c0_i32_0 = arith.constant 0 : i32
    %c0_i32_1 = arith.constant 0 : i32
    return %c0_i32, %c0_i32_0 : i32, i32
  }
  func.func @transform_8(%arg0: i32) -> (i32, i32) {
    %c0_i32 = arith.constant 0 : i32
    %c0_i32_0 = arith.constant 0 : i32
    %c0_i32_1 = arith.constant 0 : i32
    return %c0_i32, %c0_i32_0 : i32, i32
  }
  func.func @transform_9(%arg0: i32) -> (i32, i32) {
    %c0_i32 = arith.constant 0 : i32
    %c0_i32_0 = arith.constant 0 : i32
    %c0_i32_1 = arith.constant 0 : i32
    return %c0_i32, %c0_i32_0 : i32, i32
  }
  func.func @transform_10(%arg0: i32) -> (i32, i32, i32) {
    %c0_i32 = arith.constant 0 : i32
    %c0_i32_0 = arith.constant 0 : i32
    %c0_i32_1 = arith.constant 0 : i32
    %c0_i32_2 = arith.constant 0 : i32
    return %c0_i32, %c0_i32_0, %c0_i32_1 : i32, i32, i32
  }
  func.func @transform_11(%arg0: i32) -> (i32, i32) {
    %c0_i32 = arith.constant 0 : i32
    %c0_i32_0 = arith.constant 0 : i32
    %c0_i32_1 = arith.constant 0 : i32
    return %c0_i32, %c0_i32_0 : i32, i32
  }
  func.func @transform_12(%arg0: i32) -> (i32, i32) {
    %c0_i32 = arith.constant 0 : i32
    %c0_i32_0 = arith.constant 0 : i32
    %c0_i32_1 = arith.constant 0 : i32
    return %c0_i32, %c0_i32_0 : i32, i32
  }
  func.func @transform_13(%arg0: i32) -> (i32, i32) {
    %c0_i32 = arith.constant 0 : i32
    %c0_i32_0 = arith.constant 0 : i32
    %c0_i32_1 = arith.constant 0 : i32
    return %c0_i32, %c0_i32_0 : i32, i32
  }
  func.func @transform_14(%arg0: i32) -> (i32, i32, i32) {
    %c0_i32 = arith.constant 0 : i32
    %c0_i32_0 = arith.constant 0 : i32
    %c0_i32_1 = arith.constant 0 : i32
    return %arg0, %c0_i32, %c0_i32_0 : i32, i32, i32
  }
}

</mosaic_0001>

<llo_original>
// kernel: tpu_custom_call.1
$region0: #{tpu_custom_call.1}
  #allocation0 [shape = 'u32[]', space=smem, size = 0x4, offset = 0x4, fixed_abs, tag = 'smem constant byte address 0x4 - core index']
  #allocation1 [shape = 'u32[72,128]{1,0:T(1,128)}', space=vmem, size = 0x9000, scoped, tag = 'internal scratch']
  %s0 = inlined_call_operand.vmem [shape: f32[2,8,256], index: 0, kind: input, shape index: {}]
  %s1 = inlined_call_operand.vmem [shape: f32[2,16,1], index: 1, kind: input, shape index: {}]
  %s2 = inlined_call_operand.vmem [shape: f32[8,1], index: 2, kind: input, shape index: {}]
  %s3 = inlined_call_operand.vmem [shape: f32[8,1], index: 3, kind: input, shape index: {}]
  %s4 = inlined_call_operand.vmem [shape: f32[8,8], index: 4, kind: input, shape index: {}]
  %s5 = inlined_call_operand.vmem [shape: bf16[9,16,8], index: 5, kind: input, shape index: {}]
  %s6 = inlined_call_operand.vmem [shape: f32[16,1], index: 6, kind: input, shape index: {}]
  %s7 = inlined_call_operand.vmem [shape: f32[16,1], index: 7, kind: input, shape index: {}]
  %s8 = inlined_call_operand.vmem [shape: f32[16,1], index: 8, kind: input, shape index: {}]
  %s9 = inlined_call_operand.vmem [shape: f32[16,16], index: 9, kind: input, shape index: {}]
  %s10 = inlined_call_operand.vmem [shape: bf16[9,16,16], index: 10, kind: input, shape index: {}]
  %s11 = inlined_call_operand.vmem [shape: bf16[16,8], index: 11, kind: input, shape index: {}]
  %s12 = inlined_call_operand.vmem [shape: f32[16,1], index: 12, kind: input, shape index: {}]
  %s13 = inlined_call_operand.vmem [shape: f32[9,256], index: 13, kind: input, shape index: {}]
  %s14 = inlined_call_operand.hbm [shape: f32[2,16,256], index: 14, kind: output, shape index: {}]
  %s15 = sld [smem:[#allocation0]]
  $region89: #{tpu_custom_call.1} parent=0
    _
  %s17 = ssub.s32 1, %s15
  %s18 = scalar_select 0, %s17, %s15
  $region1: #{tpu_custom_call.1} parent=0
    #allocation2 [shape = 'u8[32768]{0}', space=vmem, size = 0x8000, scoped, tag = 'output window, operand 0']
    #allocation3 [shape = 's32[2]{0}', space=sflag, size = 0x8, scoped, tag = 'scoped memory for tpu_custom_call.1']
    %19 = vsyncpa [#allocation3], 0
    %s20 = scalar_lea.sflag [#allocation3], 1
    %21 = vsyncpa %s20, 0
    loop: start=0, step=1, limit=4
    $region2: #{tpu_custom_call.1} parent=1 // loop_pre_header
      _
    $region3: #{tpu_custom_call.1} parent=1 // loop_header
      %s23 = sphi 0, %s27
      %p24 = scmp.ge.s32.totalorder %s23, 4
      %s33 = sphi 0, %s35
      %s36 = sphi 0, %s33
      %s37 = sphi 0, %s36
      %s53 = sphi 0, %s37
      %s59 = sphi 0, %s61
      %s62 = sphi 0, %s59
      %s63 = sphi 0, %s62
      %s79 = sphi 0, %s63
      %s83 = sphi 0, %s83
      %s85 = sphi 0, %s83
      %s86 = sphi 0, %s85
      %s100 = sphi 0, %s86
      %s104 = sphi 0, %s104
      %s106 = sphi 0, %s104
      %s107 = sphi 0, %s106
      %s121 = sphi 0, %s107
      %s125 = sphi 0, %s125
      %s127 = sphi 0, %s125
      %s128 = sphi 0, %s127
      %s142 = sphi 0, %s128
      %s146 = sphi 0, %s146
      %s148 = sphi 0, %s146
      %s149 = sphi 0, %s148
      %s163 = sphi 0, %s149
      %s167 = sphi 0, %s167
      %s169 = sphi 0, %s167
      %s170 = sphi 0, %s169
      %s184 = sphi 0, %s170
      %s188 = sphi 0, %s188
      %s190 = sphi 0, %s188
      %s191 = sphi 0, %s190
      %s205 = sphi 0, %s191
      %s209 = sphi 0, %s209
      %s211 = sphi 0, %s209
      %s212 = sphi 0, %s211
      %s226 = sphi 0, %s212
      %s230 = sphi 0, %s230
      %s232 = sphi 0, %s230
      %s233 = sphi 0, %s232
      %s247 = sphi 0, %s233
      %s251 = sphi 0, %s251
      %s253 = sphi 0, %s251
      %s254 = sphi 0, %s253
      %s268 = sphi 0, %s254
      %s272 = sphi 0, %s272
      %s274 = sphi 0, %s272
      %s275 = sphi 0, %s274
      %s289 = sphi 0, %s275
      %s293 = sphi 0, %s293
      %s295 = sphi 0, %s293
      %s296 = sphi 0, %s295
      %s310 = sphi 0, %s296
      %s314 = sphi 0, %s314
      %s316 = sphi 0, %s314
      %s317 = sphi 0, %s316
      %s331 = sphi 0, %s317
      %s337 = sphi 0, %s339
      %s340 = sphi 0, %s337
      %s341 = sphi 0, %s340
      %s357 = sphi 0, %s341
    $region4: #{tpu_custom_call.1} parent=1 // loop_header_branch
      %26 = sbr.rel (%p24) target = $region8
    $region5: #{tpu_custom_call.1} parent=1 // loop_body
      %s28 = ssub.s32 %s23, 1
      %s29 = ssub.s32 %s23, 2
      %s30 = sadd.s32 %s23, 1
      %s31 = ssub.s32 %s23, %s30
      %p32 = scmp.eq.s32.totalorder %s31, 0
      %s34 = sadd.s32 %s33, 1
      %s35 = scalar_select %p32, %s33, %s34
      %p38 = pneg %p32
      %p39 = scmp.eq.s32.totalorder %s23, 1
      %p40 = por %p38, %p39
      %p41 = scmp.ne.s32.totalorder %s33, %s36
      %p42 = scmp.eq.s32.totalorder %s23, 0
      %p43 = por %p41, %p42
      %p44 = scmp.ne.s32.totalorder %s33, %s36
      %p45 = scmp.eq.s32.totalorder %s28, 1
      %p46 = por %p44, %p45
      %p47 = scmp.ne.s32.totalorder %s36, %s37
      %p48 = scmp.eq.s32.totalorder %s28, 0
      %p49 = por %p47, %p48
      %p50 = scmp.ne.s32.totalorder %s36, %s37
      %p51 = scmp.eq.s32.totalorder %s29, 1
      %p52 = por %p50, %p51
      %p54 = scmp.ne.s32.totalorder %s37, %s53
      %p55 = scmp.eq.s32.totalorder %s29, 0
      %p56 = por %p54, %p55
      %s57 = ssub.s32 %s23, %s30
      %p58 = scmp.eq.s32.totalorder %s57, 0
      %s60 = sadd.s32 %s59, 1
      %s61 = scalar_select %p58, %s59, %s60
      %p64 = pneg %p58
      %p65 = scmp.eq.s32.totalorder %s23, 1
      %p66 = por %p64, %p65
      %p67 = scmp.ne.s32.totalorder %s59, %s62
      %p68 = scmp.eq.s32.totalorder %s23, 0
      %p69 = por %p67, %p68
      %p70 = scmp.ne.s32.totalorder %s59, %s62
      %p71 = scmp.eq.s32.totalorder %s28, 1
      %p72 = por %p70, %p71
      %p73 = scmp.ne.s32.totalorder %s62, %s63
      %p74 = scmp.eq.s32.totalorder %s28, 0
      %p75 = por %p73, %p74
      %p76 = scmp.ne.s32.totalorder %s62, %s63
      %p77 = scmp.eq.s32.totalorder %s29, 1
      %p78 = por %p76, %p77
      %p80 = scmp.ne.s32.totalorder %s63, %s79
      %p81 = scmp.eq.s32.totalorder %s29, 0
      %p82 = por %p80, %p81
      %s84 = sadd.s32 %s83, 1
      %p87 = scmp.eq.s32.totalorder %s23, 1
      %p88 = scmp.ne.s32.totalorder %s83, %s85
      %p89 = scmp.eq.s32.totalorder %s23, 0
      %p90 = por %p88, %p89
      %p91 = scmp.ne.s32.totalorder %s83, %s85
      %p92 = scmp.eq.s32.totalorder %s28, 1
      %p93 = por %p91, %p92
      %p94 = scmp.ne.s32.totalorder %s85, %s86
      %p95 = scmp.eq.s32.totalorder %s28, 0
      %p96 = por %p94, %p95
      %p97 = scmp.ne.s32.totalorder %s85, %s86
      %p98 = scmp.eq.s32.totalorder %s29, 1
      %p99 = por %p97, %p98
      %p101 = scmp.ne.s32.totalorder %s86, %s100
      %p102 = scmp.eq.s32.totalorder %s29, 0
      %p103 = por %p101, %p102
      %s105 = sadd.s32 %s104, 1
      %p108 = scmp.eq.s32.totalorder %s23, 1
      %p109 = scmp.ne.s32.totalorder %s104, %s106
      %p110 = scmp.eq.s32.totalorder %s23, 0
      %p111 = por %p109, %p110
      %p112 = scmp.ne.s32.totalorder %s104, %s106
      %p113 = scmp.eq.s32.totalorder %s28, 1
      %p114 = por %p112, %p113
      %p115 = scmp.ne.s32.totalorder %s106, %s107
      %p116 = scmp.eq.s32.totalorder %s28, 0
      %p117 = por %p115, %p116
      %p118 = scmp.ne.s32.totalorder %s106, %s107
      %p119 = scmp.eq.s32.totalorder %s29, 1
      %p120 = por %p118, %p119
      %p122 = scmp.ne.s32.totalorder %s107, %s121
      %p123 = scmp.eq.s32.totalorder %s29, 0
      %p124 = por %p122, %p123
      %s126 = sadd.s32 %s125, 1
      %p129 = scmp.eq.s32.totalorder %s23, 1
      %p130 = scmp.ne.s32.totalorder %s125, %s127
      %p131 = scmp.eq.s32.totalorder %s23, 0
      %p132 = por %p130, %p131
      %p133 = scmp.ne.s32.totalorder %s125, %s127
      %p134 = scmp.eq.s32.totalorder %s28, 1
      %p135 = por %p133, %p134
      %p136 = scmp.ne.s32.totalorder %s127, %s128
      %p137 = scmp.eq.s32.totalorder %s28, 0
      %p138 = por %p136, %p137
      %p139 = scmp.ne.s32.totalorder %s127, %s128
      %p140 = scmp.eq.s32.totalorder %s29, 1
      %p141 = por %p139, %p140
      %p143 = scmp.ne.s32.totalorder %s128, %s142
      %p144 = scmp.eq.s32.totalorder %s29, 0
      %p145 = por %p143, %p144
      %s147 = sadd.s32 %s146, 1
      %p150 = scmp.eq.s32.totalorder %s23, 1
      %p151 = scmp.ne.s32.totalorder %s146, %s148
      %p152 = scmp.eq.s32.totalorder %s23, 0
      %p153 = por %p151, %p152
      %p154 = scmp.ne.s32.totalorder %s146, %s148
      %p155 = scmp.eq.s32.totalorder %s28, 1
      %p156 = por %p154, %p155
      %p157 = scmp.ne.s32.totalorder %s148, %s149
      %p158 = scmp.eq.s32.totalorder %s28, 0
      %p159 = por %p157, %p158
      %p160 = scmp.ne.s32.totalorder %s148, %s149
      %p161 = scmp.eq.s32.totalorder %s29, 1
      %p162 = por %p160, %p161
      %p164 = scmp.ne.s32.totalorder %s149, %s163
      %p165 = scmp.eq.s32.totalorder %s29, 0
      %p166 = por %p164, %p165
      %s168 = sadd.s32 %s167, 1
      %p171 = scmp.eq.s32.totalorder %s23, 1
      %p172 = scmp.ne.s32.totalorder %s167, %s169
      %p173 = scmp.eq.s32.totalorder %s23, 0
      %p174 = por %p172, %p173
      %p175 = scmp.ne.s32.totalorder %s167, %s169
      %p176 = scmp.eq.s32.totalorder %s28, 1
      %p177 = por %p175, %p176
      %p178 = scmp.ne.s32.totalorder %s169, %s170
      %p179 = scmp.eq.s32.totalorder %s28, 0
      %p180 = por %p178, %p179
      %p181 = scmp.ne.s32.totalorder %s169, %s170
      %p182 = scmp.eq.s32.totalorder %s29, 1
      %p183 = por %p181, %p182
      %p185 = scmp.ne.s32.totalorder %s170, %s184
      %p186 = scmp.eq.s32.totalorder %s29, 0
      %p187 = por %p185, %p186
      %s189 = sadd.s32 %s188, 1
      %p192 = scmp.eq.s32.totalorder %s23, 1
      %p193 = scmp.ne.s32.totalorder %s188, %s190
      %p194 = scmp.eq.s32.totalorder %s23, 0
      %p195 = por %p193, %p194
      %p196 = scmp.ne.s32.totalorder %s188, %s190
      %p197 = scmp.eq.s32.totalorder %s28, 1
      %p198 = por %p196, %p197
      %p199 = scmp.ne.s32.totalorder %s190, %s191
      %p200 = scmp.eq.s32.totalorder %s28, 0
      %p201 = por %p199, %p200
      %p202 = scmp.ne.s32.totalorder %s190, %s191
      %p203 = scmp.eq.s32.totalorder %s29, 1
      %p204 = por %p202, %p203
      %p206 = scmp.ne.s32.totalorder %s191, %s205
      %p207 = scmp.eq.s32.totalorder %s29, 0
      %p208 = por %p206, %p207
      %s210 = sadd.s32 %s209, 1
      %p213 = scmp.eq.s32.totalorder %s23, 1
      %p214 = scmp.ne.s32.totalorder %s209, %s211
      %p215 = scmp.eq.s32.totalorder %s23, 0
      %p216 = por %p214, %p215
      %p217 = scmp.ne.s32.totalorder %s209, %s211
      %p218 = scmp.eq.s32.totalorder %s28, 1
      %p219 = por %p217, %p218
      %p220 = scmp.ne.s32.totalorder %s211, %s212
      %p221 = scmp.eq.s32.totalorder %s28, 0
      %p222 = por %p220, %p221
      %p223 = scmp.ne.s32.totalorder %s211, %s212
      %p224 = scmp.eq.s32.totalorder %s29, 1
      %p225 = por %p223, %p224
      %p227 = scmp.ne.s32.totalorder %s212, %s226
      %p228 = scmp.eq.s32.totalorder %s29, 0
      %p229 = por %p227, %p228
      %s231 = sadd.s32 %s230, 1
      %p234 = scmp.eq.s32.totalorder %s23, 1
      %p235 = scmp.ne.s32.totalorder %s230, %s232
      %p236 = scmp.eq.s32.totalorder %s23, 0
      %p237 = por %p235, %p236
      %p238 = scmp.ne.s32.totalorder %s230, %s232
      %p239 = scmp.eq.s32.totalorder %s28, 1
      %p240 = por %p238, %p239
      %p241 = scmp.ne.s32.totalorder %s232, %s233
      %p242 = scmp.eq.s32.totalorder %s28, 0
      %p243 = por %p241, %p242
      %p244 = scmp.ne.s32.totalorder %s232, %s233
      %p245 = scmp.eq.s32.totalorder %s29, 1
      %p246 = por %p244, %p245
      %p248 = scmp.ne.s32.totalorder %s233, %s247
      %p249 = scmp.eq.s32.totalorder %s29, 0
      %p250 = por %p248, %p249
      %s252 = sadd.s32 %s251, 1
      %p255 = scmp.eq.s32.totalorder %s23, 1
      %p256 = scmp.ne.s32.totalorder %s251, %s253
      %p257 = scmp.eq.s32.totalorder %s23, 0
      %p258 = por %p256, %p257
      %p259 = scmp.ne.s32.totalorder %s251, %s253
      %p260 = scmp.eq.s32.totalorder %s28, 1
      %p261 = por %p259, %p260
      %p262 = scmp.ne.s32.totalorder %s253, %s254
      %p263 = scmp.eq.s32.totalorder %s28, 0
      %p264 = por %p262, %p263
      %p265 = scmp.ne.s32.totalorder %s253, %s254
      %p266 = scmp.eq.s32.totalorder %s29, 1
      %p267 = por %p265, %p266
      %p269 = scmp.ne.s32.totalorder %s254, %s268
      %p270 = scmp.eq.s32.totalorder %s29, 0
      %p271 = por %p269, %p270
      %s273 = sadd.s32 %s272, 1
      %p276 = scmp.eq.s32.totalorder %s23, 1
      %p277 = scmp.ne.s32.totalorder %s272, %s274
      %p278 = scmp.eq.s32.totalorder %s23, 0
      %p279 = por %p277, %p278
      %p280 = scmp.ne.s32.totalorder %s272, %s274
      %p281 = scmp.eq.s32.totalorder %s28, 1
      %p282 = por %p280, %p281
      %p283 = scmp.ne.s32.totalorder %s274, %s275
      %p284 = scmp.eq.s32.totalorder %s28, 0
      %p285 = por %p283, %p284
      %p286 = scmp.ne.s32.totalorder %s274, %s275
      %p287 = scmp.eq.s32.totalorder %s29, 1
      %p288 = por %p286, %p287
      %p290 = scmp.ne.s32.totalorder %s275, %s289
      %p291 = scmp.eq.s32.totalorder %s29, 0
      %p292 = por %p290, %p291
      %s294 = sadd.s32 %s293, 1
      %p297 = scmp.eq.s32.totalorder %s23, 1
      %p298 = scmp.ne.s32.totalorder %s293, %s295
      %p299 = scmp.eq.s32.totalorder %s23, 0
      %p300 = por %p298, %p299
      %p301 = scmp.ne.s32.totalorder %s293, %s295
      %p302 = scmp.eq.s32.totalorder %s28, 1
      %p303 = por %p301, %p302
      %p304 = scmp.ne.s32.totalorder %s295, %s296
      %p305 = scmp.eq.s32.totalorder %s28, 0
      %p306 = por %p304, %p305
      %p307 = scmp.ne.s32.totalorder %s295, %s296
      %p308 = scmp.eq.s32.totalorder %s29, 1
      %p309 = por %p307, %p308
      %p311 = scmp.ne.s32.totalorder %s296, %s310
      %p312 = scmp.eq.s32.totalorder %s29, 0
      %p313 = por %p311, %p312
      %s315 = sadd.s32 %s314, 1
      %p318 = scmp.eq.s32.totalorder %s23, 1
      %p319 = scmp.ne.s32.totalorder %s314, %s316
      %p320 = scmp.eq.s32.totalorder %s23, 0
      %p321 = por %p319, %p320
      %p322 = scmp.ne.s32.totalorder %s314, %s316
      %p323 = scmp.eq.s32.totalorder %s28, 1
      %p324 = por %p322, %p323
      %p325 = scmp.ne.s32.totalorder %s316, %s317
      %p326 = scmp.eq.s32.totalorder %s28, 0
      %p327 = por %p325, %p326
      %p328 = scmp.ne.s32.totalorder %s316, %s317
      %p329 = scmp.eq.s32.totalorder %s29, 1
      %p330 = por %p328, %p329
      %p332 = scmp.ne.s32.totalorder %s317, %s331
      %p333 = scmp.eq.s32.totalorder %s29, 0
      %p334 = por %p332, %p333
      %s335 = ssub.s32 %s23, %s30
      %p336 = scmp.eq.s32.totalorder %s335, 0
      %s338 = sadd.s32 %s337, 1
      %s339 = scalar_select %p336, %s337, %s338
      %p342 = pneg %p336
      %p343 = scmp.eq.s32.totalorder %s23, 1
      %p344 = por %p342, %p343
      %p345 = scmp.ne.s32.totalorder %s337, %s340
      %p346 = scmp.eq.s32.totalorder %s23, 0
      %p347 = por %p345, %p346
      %p348 = scmp.ne.s32.totalorder %s337, %s340
      %p349 = scmp.eq.s32.totalorder %s28, 1
      %p350 = por %p348, %p349
      %p351 = scmp.ne.s32.totalorder %s340, %s341
      %p352 = scmp.eq.s32.totalorder %s28, 0
      %p353 = por %p351, %p352
      %p354 = scmp.ne.s32.totalorder %s340, %s341
      %p355 = scmp.eq.s32.totalorder %s29, 1
      %p356 = por %p354, %p355
      %p358 = scmp.ne.s32.totalorder %s341, %s357
      %p359 = scmp.eq.s32.totalorder %s29, 0
      %p360 = por %p358, %p359
      %p361 = scmp.le.s32.totalorder 1, %s23
      %p362 = scmp.lt.s32.totalorder %s23, 3
      %p363 = pnand %p361, %p362
      %p364 = pneg %p363
      // Predicated region
      $region9: #{tpu_custom_call.1} parent=5 // pred_check
        _
      $region10: #{tpu_custom_call.1} parent=5 // pred_check_branch
        %366 = sbr.rel (%p363) target = $region12
      $region11: #{tpu_custom_call.1} parent=5 // pred_region
        %s367 = ssub.s32 %s23, 1
        // Predicated region
        $region13: #{tpu_custom_call.1} parent=11 // pred_check
          %p368 = pneg %p96
        $region14: #{tpu_custom_call.1} parent=11 // pred_check_branch
          %370 = sbr.rel (%p368) target = $region16
        $region15: #{tpu_custom_call.1} parent=11 // pred_region
          _
        $region16: #{tpu_custom_call.1} parent=11 // pred_fallthru
          _
        // Predicated region
        $region17: #{tpu_custom_call.1} parent=11 // pred_check
          %p371 = pneg %p117
        $region18: #{tpu_custom_call.1} parent=11 // pred_check_branch
          %373 = sbr.rel (%p371) target = $region20
        $region19: #{tpu_custom_call.1} parent=11 // pred_region
          _
        $region20: #{tpu_custom_call.1} parent=11 // pred_fallthru
          _
        // Predicated region
        $region21: #{tpu_custom_call.1} parent=11 // pred_check
          %p374 = pneg %p138
        $region22: #{tpu_custom_call.1} parent=11 // pred_check_branch
          %376 = sbr.rel (%p374) target = $region24
        $region23: #{tpu_custom_call.1} parent=11 // pred_region
          _
        $region24: #{tpu_custom_call.1} parent=11 // pred_fallthru
          _
        // Predicated region
        $region25: #{tpu_custom_call.1} parent=11 // pred_check
          %p377 = pneg %p159
        $region26: #{tpu_custom_call.1} parent=11 // pred_check_branch
          %379 = sbr.rel (%p377) target = $region28
        $region27: #{tpu_custom_call.1} parent=11 // pred_region
          _
        $region28: #{tpu_custom_call.1} parent=11 // pred_fallthru
          _
        // Predicated region
        $region29: #{tpu_custom_call.1} parent=11 // pred_check
          %p380 = pneg %p180
        $region30: #{tpu_custom_call.1} parent=11 // pred_check_branch
          %382 = sbr.rel (%p380) target = $region32
        $region31: #{tpu_custom_call.1} parent=11 // pred_region
          _
        $region32: #{tpu_custom_call.1} parent=11 // pred_fallthru
          _
        // Predicated region
        $region33: #{tpu_custom_call.1} parent=11 // pred_check
          %p383 = pneg %p201
        $region34: #{tpu_custom_call.1} parent=11 // pred_check_branch
          %385 = sbr.rel (%p383) target = $region36
        $region35: #{tpu_custom_call.1} parent=11 // pred_region
          _
        $region36: #{tpu_custom_call.1} parent=11 // pred_fallthru
          _
        // Predicated region
        $region37: #{tpu_custom_call.1} parent=11 // pred_check
          %p386 = pneg %p222
        $region38: #{tpu_custom_call.1} parent=11 // pred_check_branch
          %388 = sbr.rel (%p386) target = $region40
        $region39: #{tpu_custom_call.1} parent=11 // pred_region
          _
        $region40: #{tpu_custom_call.1} parent=11 // pred_fallthru
          _
        // Predicated region
        $region41: #{tpu_custom_call.1} parent=11 // pred_check
          %p389 = pneg %p243
        $region42: #{tpu_custom_call.1} parent=11 // pred_check_branch
          %391 = sbr.rel (%p389) target = $region44
        $region43: #{tpu_custom_call.1} parent=11 // pred_region
          _
        $region44: #{tpu_custom_call.1} parent=11 // pred_fallthru
          _
        // Predicated region
        $region45: #{tpu_custom_call.1} parent=11 // pred_check
          %p392 = pneg %p264
        $region46: #{tpu_custom_call.1} parent=11 // pred_check_branch
          %394 = sbr.rel (%p392) target = $region48
        $region47: #{tpu_custom_call.1} parent=11 // pred_region
          _
        $region48: #{tpu_custom_call.1} parent=11 // pred_fallthru
          _
        // Predicated region
        $region49: #{tpu_custom_call.1} parent=11 // pred_check
          %p395 = pneg %p285
        $region50: #{tpu_custom_call.1} parent=11 // pred_check_branch
          %397 = sbr.rel (%p395) target = $region52
        $region51: #{tpu_custom_call.1} parent=11 // pred_region
          _
        $region52: #{tpu_custom_call.1} parent=11 // pred_fallthru
          _
        // Predicated region
        $region53: #{tpu_custom_call.1} parent=11 // pred_check
          %p398 = pneg %p306
        $region54: #{tpu_custom_call.1} parent=11 // pred_check_branch
          %400 = sbr.rel (%p398) target = $region56
        $region55: #{tpu_custom_call.1} parent=11 // pred_region
          _
        $region56: #{tpu_custom_call.1} parent=11 // pred_fallthru
          _
        // Predicated region
        $region57: #{tpu_custom_call.1} parent=11 // pred_check
          %p401 = pneg %p327
        $region58: #{tpu_custom_call.1} parent=11 // pred_check_branch
          %403 = sbr.rel (%p401) target = $region60
        $region59: #{tpu_custom_call.1} parent=11 // pred_region
          _
        $region60: #{tpu_custom_call.1} parent=11 // pred_fallthru
          _
      $region12: #{tpu_custom_call.1} parent=5 // pred_fallthru
        _
      %p404 = scmp.lt.s32.totalorder %s23, 2
      // Predicated region
      $region61: #{tpu_custom_call.1} parent=5 // pred_check
        %p405 = pneg %p404
      $region62: #{tpu_custom_call.1} parent=5 // pred_check_branch
        %407 = sbr.rel (%p405) target = $region64
      $region63: #{tpu_custom_call.1} parent=5 // pred_region
        // Predicated region
        $region65: #{tpu_custom_call.1} parent=63 // pred_check
          %p408 = pneg %p43
        $region66: #{tpu_custom_call.1} parent=63 // pred_check_branch
          %410 = sbr.rel (%p408) target = $region68
        $region67: #{tpu_custom_call.1} parent=63 // pred_region
          %p411 = scmp.lt.s32.totalorder %s23, 1
          %s412 = scalar_select %p411, %s23, 1
          %s413 = smul.addr %s412, 2
          %s414 = smul.addr %s413, 8
          %s415 = scalar_lea.vmem %s0, %s414
        $region68: #{tpu_custom_call.1} parent=63 // pred_fallthru
          _
        // Predicated region
        $region69: #{tpu_custom_call.1} parent=63 // pred_check
          %p416 = pneg %p69
        $region70: #{tpu_custom_call.1} parent=63 // pred_check_branch
          %418 = sbr.rel (%p416) target = $region72
        $region71: #{tpu_custom_call.1} parent=63 // pred_region
          %p419 = scmp.lt.s32.totalorder %s23, 1
          %s420 = scalar_select %p419, %s23, 1
          %s421 = smul.addr %s420, 2
          %s422 = smul.addr %s421, 8
          %s423 = scalar_lea.vmem %s1, %s422
        $region72: #{tpu_custom_call.1} parent=63 // pred_fallthru
          _
      $region64: #{tpu_custom_call.1} parent=5 // pred_fallthru
        _
      %p424 = scmp.le.s32.totalorder 1, %s23
      %p425 = scmp.lt.s32.totalorder %s23, 3
      %p426 = pnand %p424, %p425
      %p427 = pneg %p426
      // Predicated region
      $region73: #{tpu_custom_call.1} parent=5 // pred_check
        _
      $region74: #{tpu_custom_call.1} parent=5 // pred_check_branch
        %429 = sbr.rel (%p426) target = $region76
      $region75: #{tpu_custom_call.1} parent=5 // pred_region
        %s430 = ssub.s32 %s23, 1
        %p431 = scmp.lt.s32.totalorder %s28, 1
        %s432 = scalar_select %p431, %s28, 1
        %s433 = smul.addr %s432, 2
        %s434 = smul.addr %s433, 8
        %s435 = scalar_lea.vmem %s0, %s434
        %p436 = pneg %p49
        %p437 = pneg %p46
        %p438 = scmp.lt.s32.totalorder %s28, 1
        %s439 = scalar_select %p438, %s28, 1
        %s440 = smul.addr %s439, 2
        %s441 = smul.addr %s440, 8
        %s442 = scalar_lea.vmem %s1, %s441
        %p443 = pneg %p75
        %p444 = pneg %p72
        %p445 = pneg %p96
        %p446 = pneg %p93
        %p447 = pneg %p117
        %p448 = pneg %p114
        %p449 = pneg %p138
        %p450 = pneg %p135
        %p451 = pneg %p159
        %p452 = pneg %p156
        %p453 = pneg %p180
        %p454 = pneg %p177
        %p455 = pneg %p201
        %p456 = pneg %p198
        %p457 = pneg %p222
        %p458 = pneg %p219
        %p459 = pneg %p243
        %p460 = pneg %p240
        %p461 = pneg %p264
        %p462 = pneg %p261
        %p463 = pneg %p285
        %p464 = pneg %p282
        %p465 = pneg %p306
        %p466 = pneg %p303
        %p467 = pneg %p327
        %p468 = pneg %p324
        %p469 = pneg %p353
        %p470 = pneg %p350
        %s471 = sand.u32 %s340, 1
        %s472 = scalar_lea.sflag [#allocation3], %s471
        %s473 = sand.u32 %s340, 1
        %s474 = smul.addr %s473, 32
        %s475 = scalar_lea.vmem [#allocation2], %s474
        %p476 = scmp.lt.s32.totalorder %s28, 1
        %s477 = scalar_select %p476, %s28, 1
        %s478 = smul.addr %s477, 2
        %s479 = smul.addr %s478, 8
        %s480 = scalar_lea.vmem %s0, %s479
        %p481 = scmp.lt.s32.totalorder %s28, 1
        %s482 = scalar_select %p481, %s28, 1
        %s483 = smul.addr %s482, 2
        %s484 = smul.addr %s483, 8
        %s485 = scalar_lea.vmem %s1, %s484
        %v487 = vld [vmem:[%s480] sm:$0xff]
        %v488 = vld [vmem:[%s480 + $0x8] sm:$0xff]
        %v489 = vadd.f32 %v487, %v488
        %490 = vadd.xlane.f32.xlu0 %v489
        %v491 = vpop.xlane.xlu0 %490
        %v492 = vmul.f32 %v487, %v487
        %v493 = vmul.f32 %v488, %v488
        %v494 = vadd.f32 %v492, %v493
        %495 = vadd.xlane.f32.xlu0 %v494
        %v496 = vpop.xlane.xlu0 %495
        %v497 = vld [vmem:[%s4] sm:$0xff]
        %vm498 = vcmask 7168
        %v499 = vsel %vm498, %v491, %v496
        %vm500 = vcmask 64512
        %v502 = vsel %vm500, %v497, 0
        %504 = vmatpush.msra.mxu0 0.0
        %505 = vmatpush.msra.mxu0 0.0
        %506 = vmatpush.msra.mxu0 0.0
        %507 = vmatpush.msra.mxu0 0.0
        %508 = vmatpush.msra.mxu0 0.0
        %509 = vmatpush.msra.mxu0 0.0
        %510 = vmatpush.msra.mxu0 0.0
        %511 = vmatpush.msra.mxu0 0.0
        %512 = vmatpush.msra.mxu0 0.0
        %513 = vmatpush.msra.mxu0 0.0
        %514 = vmatpush.msra.mxu0 0.0
        %515 = vmatpush.msra.mxu0 0.0
        %516 = vmatpush.msra.mxu0 0.0
        %517 = vmatpush.msra.mxu0 0.0
        %518 = vmatpush.msra.mxu0 0.0
        %519 = vmatpush.msra.mxu0 %v499
        %520 = vmatmul.f32.gmra.mxu0 %v502
        %v521 = vpop.f32.mrf.mxu0
        %v522 = vadd.f32 0.0, %v521
        %523 = vdwg.mxu0
        %v524 = vmul.f32 %v522, %v522
        %526 = vrot.lane.b32.xlu0 %v524, 1
        %v527 = vpop.permute.xlu0 %526
        %v529 = vsub.f32 %v522, %v527
        %v530 = vadd.f32 %v529, 1e-05
        %v531 = vrsqrt.pop %v530
        %v532 = vmul.f32 %v531, %v530
        %v533 = vmul.f32 %v532, %v531
        %v534 = vmul.f32 0.5, %v533
        %v535 = vsub.f32 1.5, %v534
        %v536 = vmul.f32 %v531, %v535
        %vm537 = vweird.f32 %v530
        %vm538 = vweird.f32 %v531
        %vm539 = vmor %vm537, %vm538
        %v540 = vsel %vm539, %v531, %v536
        %542 = vset.pattern.permute.xlu0 0
        %543 = vperm.xlu0 %542, %v522
        %v544 = vpop.permute.xlu0 %543
        %v546 = vsub.f32 %v487, %v544
        %v547 = vsub.f32 %v488, %v544
        %v548 = vld [vmem:[%s2] sm:$0xff]
        %550 = vrot.lane.b32.xlu0 %v548, 1
        %v551 = vpop.permute.xlu0 %550
        %v553 = vmul.f32 %v540, %v551
        %555 = vset.pattern.permute.xlu0 1
        %556 = vperm.xlu0 %555, %v553
        %v557 = vpop.permute.xlu0 %556
        %v559 = vmul.f32 %v546, %v557
        %v560 = vmul.f32 %v547, %v557
        %v561 = vld [vmem:[%s3] sm:$0xff]
        %563 = vset.pattern.permute.xlu0 0
        %564 = vperm.xlu0 %563, %v561
        %v565 = vpop.permute.xlu0 %564
        %v567 = vadd.f32 %v559, %v565
        %v568 = vadd.f32 %v560, %v565
        %v569 = vxor.u32 %v567, 2147483648
        %v570 = vxor.u32 %v568, 2147483648
        %v571 = vmul.f32 %v569, 1.442695
        %v572 = vpow.pop %v571
        %v573 = vmul.f32 %v570, 1.442695
        %v574 = vpow.pop %v573
        %v575 = vadd.f32 %v572, 1.0
        %v576 = vadd.f32 %v574, 1.0
        %v577 = vrcp.pop %v575
        %v578 = vmul.f32 %v575, %v577
        %v579 = vsub.f32 1.0, %v578
        %v580 = vmul.f32 %v577, %v579
        %v581 = vadd.f32 %v577, %v580
        %vm582 = vweird.f32 %v575
        %vm583 = vweird.f32 %v577
        %vm584 = vmor %vm582, %vm583
        %v585 = vsel %vm584, %v577, %v581
        %v586 = vand.u32 2147483647, %v575
        %vm587 = vcmp.eq.f32.partialorder %v586, 8.507059e+37
        %v588 = vand.u32 %v575, 2147483648
        %v589 = vor.u32 1.1754944e-38, %v588
        %v590 = vsel %vm587, %v589, %v585
        %v591 = vmul.f32 1.0, %v590
        %v592 = vrcp.pop %v576
        %v593 = vmul.f32 %v576, %v592
        %v594 = vsub.f32 1.0, %v593
        %v595 = vmul.f32 %v592, %v594
        %v596 = vadd.f32 %v592, %v595
        %vm597 = vweird.f32 %v576
        %vm598 = vweird.f32 %v592
        %vm599 = vmor %vm597, %vm598
        %v600 = vsel %vm599, %v592, %v596
        %v601 = vand.u32 2147483647, %v576
        %vm602 = vcmp.eq.f32.partialorder %v601, 8.507059e+37
        %v603 = vand.u32 %v576, 2147483648
        %v604 = vor.u32 1.1754944e-38, %v603
        %v605 = vsel %vm602, %v604, %v600
        %v606 = vmul.f32 1.0, %v605
        %v607 = vmul.f32 %v567, %v591
        %v608 = vmul.f32 %v568, %v606
        %v609 = vld [vmem:[%s6] sm:$0xff]
        %v610 = vld [vmem:[%s6 + $0x8] sm:$0xff]
        %611 = vrot.lane.b32.xlu0 %v607, 17
        %v612 = vpop.permute.xlu0 %611
        %613 = vrot.lane.b32.xlu0 %v608, 17
        %v614 = vpop.permute.xlu0 %613
        %v615 = vlaneseq
        %v616 = vand.u32 %v615, 127
        %vm617 = vcmp.lt.s32.totalorder %v616, 17
        %v618 = vsel %vm617, %v612, %v614
        %v619 = vsel %vm617, %v614, %v612
        %v620 = vld [vmem:[%s13] ss:$8 sm:$0x3]
        %v622 = vperm.slane %v620, 0
        %v623 = vperm.slane %v620, 1
        %v626 = vmul.f32 %v619, %v622
        %v627 = vmul.f32 %v618, %v623
        %v628 = vpack.c.bf16 %v626, %v626
        %v629 = vpack.c.bf16 %v627, %v627
        %v630 = vld [vmem:[%s5] sm:$0xf]
        %v631 = vld [vmem:[%s5 + $0x4] sm:$0xf]
        %632 = vrot.lane.b32.xlu0 %v607, 16
        %v633 = vpop.permute.xlu0 %632
        %634 = vrot.lane.b32.xlu0 %v608, 16
        %v635 = vpop.permute.xlu0 %634
        %vm636 = vcmp.lt.s32.totalorder %v616, 16
        %v637 = vsel %vm636, %v633, %v635
        %v638 = vsel %vm636, %v635, %v633
        %s639 = scalar_lea.vmem %s13, 1
        %v640 = vld [vmem:[%s639] ss:$8 sm:$0x3]
        %v642 = vperm.slane %v640, 0
        %v643 = vperm.slane %v640, 1
        %v646 = vmul.f32 %v638, %v642
        %v647 = vmul.f32 %v637, %v643
        %v648 = vpack.c.bf16 %v646, %v646
        %v649 = vpack.c.bf16 %v647, %v647
        %s650 = scalar_lea.vmem %s5, 8
        %v651 = vld [vmem:[%s650] sm:$0xf]
        %v652 = vld [vmem:[%s650 + $0x4] sm:$0xf]
        %v655 = vunpack.c.l.b16 %v651
        %v656 = vunpack.c.l.b16 %v652
        %v657 = vpack.c.b16 %v656, %v655
        %v659 = vsel %vm500, %v657, 0
        %vm661 = vcmask 1043456
        %v663 = vsel %vm661, %v648, 0
        %v666 = vsel %vm661, %v649, 0
        %668 = vmatpush.bf16.msra.mxu0 0
        %669 = vmatpush.bf16.msra.mxu0 0
        %670 = vmatpush.bf16.msra.mxu0 0
        %671 = vmatpush.bf16.msra.mxu0 0
        %672 = vmatpush.bf16.msra.mxu0 0
        %673 = vmatpush.bf16.msra.mxu0 0
        %674 = vmatpush.bf16.msra.mxu0 0
        %675 = vmatpush.bf16.msra.mxu0 %v663
        %676 = vmatmul.bf16.gmra.mxu0 %v659
        %v677 = vpop.f32.mrf.mxu0
        %v678 = vadd.f32 0.0, %v677
        %v679 = vpop.f32.mrf.mxu0
        %v680 = vadd.f32 0.0, %v679
        %681 = vdwg.mxu0
        %682 = vmatpush.bf16.msra.mxu0 0
        %683 = vmatpush.bf16.msra.mxu0 0
        %684 = vmatpush.bf16.msra.mxu0 0
        %685 = vmatpush.bf16.msra.mxu0 0
        %686 = vmatpush.bf16.msra.mxu0 0
        %687 = vmatpush.bf16.msra.mxu0 0
        %688 = vmatpush.bf16.msra.mxu0 0
        %689 = vmatpush.bf16.msra.mxu0 %v666
        %690 = vmatmul.bf16.gmra.mxu0 %v659
        %v691 = vpop.f32.mrf.mxu0
        %v692 = vadd.f32 0.0, %v691
        %v693 = vpop.f32.mrf.mxu0
        %v694 = vadd.f32 0.0, %v693
        %695 = vdwg.mxu0
        %v698 = vunpack.c.l.b16 %v630
        %v699 = vunpack.c.l.b16 %v631
        %v700 = vpack.c.b16 %v699, %v698
        %v702 = vsel %vm500, %v700, 0
        %v705 = vsel %vm661, %v628, 0
        %v708 = vsel %vm661, %v629, 0
        %710 = vmatpush.bf16.msra.mxu0 0
        %711 = vmatpush.bf16.msra.mxu0 0
        %712 = vmatpush.bf16.msra.mxu0 0
        %713 = vmatpush.bf16.msra.mxu0 0
        %714 = vmatpush.bf16.msra.mxu0 0
        %715 = vmatpush.bf16.msra.mxu0 0
        %716 = vmatpush.bf16.msra.mxu0 0
        %717 = vmatpush.bf16.msra.mxu0 %v705
        %718 = vmatmul.bf16.gmra.mxu0 %v702
        %v719 = vpop.f32.mrf.mxu0
        %v720 = vadd.f32 %v678, %v719
        %v721 = vpop.f32.mrf.mxu0
        %v722 = vadd.f32 %v680, %v721
        %723 = vdwg.mxu0
        %724 = vmatpush.bf16.msra.mxu0 0
        %725 = vmatpush.bf16.msra.mxu0 0
        %726 = vmatpush.bf16.msra.mxu0 0
        %727 = vmatpush.bf16.msra.mxu0 0
        %728 = vmatpush.bf16.msra.mxu0 0
        %729 = vmatpush.bf16.msra.mxu0 0
        %730 = vmatpush.bf16.msra.mxu0 0
        %731 = vmatpush.bf16.msra.mxu0 %v708
        %732 = vmatmul.bf16.gmra.mxu0 %v702
        %v733 = vpop.f32.mrf.mxu0
        %v734 = vadd.f32 %v692, %v733
        %v735 = vpop.f32.mrf.mxu0
        %v736 = vadd.f32 %v694, %v735
        %737 = vdwg.mxu0
        %738 = vrot.lane.b32.xlu0 %v607, 15
        %v739 = vpop.permute.xlu0 %738
        %740 = vrot.lane.b32.xlu0 %v608, 15
        %v741 = vpop.permute.xlu0 %740
        %vm742 = vcmp.lt.s32.totalorder %v616, 15
        %v743 = vsel %vm742, %v739, %v741
        %v744 = vsel %vm742, %v741, %v739
        %s745 = scalar_lea.vmem %s13, 2
        %v746 = vld [vmem:[%s745] ss:$8 sm:$0x3]
        %v748 = vperm.slane %v746, 0
        %v749 = vperm.slane %v746, 1
        %v752 = vmul.f32 %v744, %v748
        %v753 = vmul.f32 %v743, %v749
        %v754 = vpack.c.bf16 %v752, %v752
        %v755 = vpack.c.bf16 %v753, %v753
        %s756 = scalar_lea.vmem %s5, 16
        %v757 = vld [vmem:[%s756] sm:$0xf]
        %v758 = vld [vmem:[%s756 + $0x4] sm:$0xf]
        %v761 = vunpack.c.l.b16 %v757
        %v762 = vunpack.c.l.b16 %v758
        %v763 = vpack.c.b16 %v762, %v761
        %v765 = vsel %vm500, %v763, 0
        %v768 = vsel %vm661, %v754, 0
        %v771 = vsel %vm661, %v755, 0
        %773 = vmatpush.bf16.msra.mxu0 0
        %774 = vmatpush.bf16.msra.mxu0 0
        %775 = vmatpush.bf16.msra.mxu0 0
        %776 = vmatpush.bf16.msra.mxu0 0
        %777 = vmatpush.bf16.msra.mxu0 0
        %778 = vmatpush.bf16.msra.mxu0 0
        %779 = vmatpush.bf16.msra.mxu0 0
        %780 = vmatpush.bf16.msra.mxu0 %v768
        %781 = vmatmul.bf16.gmra.mxu0 %v765
        %v782 = vpop.f32.mrf.mxu0
        %v783 = vadd.f32 0.0, %v782
        %v784 = vpop.f32.mrf.mxu0
        %v785 = vadd.f32 0.0, %v784
        %786 = vdwg.mxu0
        %787 = vmatpush.bf16.msra.mxu0 0
        %788 = vmatpush.bf16.msra.mxu0 0
        %789 = vmatpush.bf16.msra.mxu0 0
        %790 = vmatpush.bf16.msra.mxu0 0
        %791 = vmatpush.bf16.msra.mxu0 0
        %792 = vmatpush.bf16.msra.mxu0 0
        %793 = vmatpush.bf16.msra.mxu0 0
        %794 = vmatpush.bf16.msra.mxu0 %v771
        %795 = vmatmul.bf16.gmra.mxu0 %v765
        %v796 = vpop.f32.mrf.mxu0
        %v797 = vadd.f32 0.0, %v796
        %v798 = vpop.f32.mrf.mxu0
        %v799 = vadd.f32 0.0, %v798
        %800 = vdwg.mxu0
        %v801 = vadd.f32 %v720, %v783
        %v802 = vadd.f32 %v734, %v797
        %v803 = vadd.f32 %v722, %v785
        %v804 = vadd.f32 %v736, %v799
        %805 = vrot.lane.b32.xlu0 %v607, 1
        %v806 = vpop.permute.xlu0 %805
        %807 = vrot.lane.b32.xlu0 %v608, 1
        %v808 = vpop.permute.xlu0 %807
        %vm809 = vcmp.lt.s32.totalorder %v616, 1
        %v810 = vsel %vm809, %v806, %v808
        %v811 = vsel %vm809, %v808, %v806
        %s812 = scalar_lea.vmem %s13, 3
        %v813 = vld [vmem:[%s812] ss:$8 sm:$0x3]
        %v815 = vperm.slane %v813, 0
        %v816 = vperm.slane %v813, 1
        %v819 = vmul.f32 %v811, %v815
        %v820 = vmul.f32 %v810, %v816
        %v821 = vpack.c.bf16 %v819, %v819
        %v822 = vpack.c.bf16 %v820, %v820
        %s823 = scalar_lea.vmem %s5, 24
        %v824 = vld [vmem:[%s823] sm:$0xf]
        %v825 = vld [vmem:[%s823 + $0x4] sm:$0xf]
        %v828 = vunpack.c.l.b16 %v824
        %v829 = vunpack.c.l.b16 %v825
        %v830 = vpack.c.b16 %v829, %v828
        %v832 = vsel %vm500, %v830, 0
        %v835 = vsel %vm661, %v821, 0
        %v838 = vsel %vm661, %v822, 0
        %840 = vmatpush.bf16.msra.mxu0 0
        %841 = vmatpush.bf16.msra.mxu0 0
        %842 = vmatpush.bf16.msra.mxu0 0
        %843 = vmatpush.bf16.msra.mxu0 0
        %844 = vmatpush.bf16.msra.mxu0 0
        %845 = vmatpush.bf16.msra.mxu0 0
        %846 = vmatpush.bf16.msra.mxu0 0
        %847 = vmatpush.bf16.msra.mxu0 %v835
        %848 = vmatmul.bf16.gmra.mxu0 %v832
        %v849 = vpop.f32.mrf.mxu0
        %v850 = vadd.f32 0.0, %v849
        %v851 = vpop.f32.mrf.mxu0
        %v852 = vadd.f32 0.0, %v851
        %853 = vdwg.mxu0
        %854 = vmatpush.bf16.msra.mxu0 0
        %855 = vmatpush.bf16.msra.mxu0 0
        %856 = vmatpush.bf16.msra.mxu0 0
        %857 = vmatpush.bf16.msra.mxu0 0
        %858 = vmatpush.bf16.msra.mxu0 0
        %859 = vmatpush.bf16.msra.mxu0 0
        %860 = vmatpush.bf16.msra.mxu0 0
        %861 = vmatpush.bf16.msra.mxu0 %v838
        %862 = vmatmul.bf16.gmra.mxu0 %v832
        %v863 = vpop.f32.mrf.mxu0
        %v864 = vadd.f32 0.0, %v863
        %v865 = vpop.f32.mrf.mxu0
        %v866 = vadd.f32 0.0, %v865
        %867 = vdwg.mxu0
        %v868 = vadd.f32 %v801, %v850
        %v869 = vadd.f32 %v802, %v864
        %v870 = vadd.f32 %v803, %v852
        %v871 = vadd.f32 %v804, %v866
        %v872 = vpack.c.bf16 %v607, %v607
        %v873 = vpack.c.bf16 %v608, %v608
        %s874 = scalar_lea.vmem %s5, 32
        %v875 = vld [vmem:[%s874] sm:$0xf]
        %v876 = vld [vmem:[%s874 + $0x4] sm:$0xf]
        %v879 = vunpack.c.l.b16 %v875
        %v880 = vunpack.c.l.b16 %v876
        %v881 = vpack.c.b16 %v880, %v879
        %v883 = vsel %vm500, %v881, 0
        %v886 = vsel %vm661, %v872, 0
        %v889 = vsel %vm661, %v873, 0
        %891 = vmatpush.bf16.msra.mxu0 0
        %892 = vmatpush.bf16.msra.mxu0 0
        %893 = vmatpush.bf16.msra.mxu0 0
        %894 = vmatpush.bf16.msra.mxu0 0
        %895 = vmatpush.bf16.msra.mxu0 0
        %896 = vmatpush.bf16.msra.mxu0 0
        %897 = vmatpush.bf16.msra.mxu0 0
        %898 = vmatpush.bf16.msra.mxu0 %v886
        %899 = vmatmul.bf16.gmra.mxu0 %v883
        %v900 = vpop.f32.mrf.mxu0
        %v901 = vadd.f32 0.0, %v900
        %v902 = vpop.f32.mrf.mxu0
        %v903 = vadd.f32 0.0, %v902
        %904 = vdwg.mxu0
        %905 = vmatpush.bf16.msra.mxu0 0
        %906 = vmatpush.bf16.msra.mxu0 0
        %907 = vmatpush.bf16.msra.mxu0 0
        %908 = vmatpush.bf16.msra.mxu0 0
        %909 = vmatpush.bf16.msra.mxu0 0
        %910 = vmatpush.bf16.msra.mxu0 0
        %911 = vmatpush.bf16.msra.mxu0 0
        %912 = vmatpush.bf16.msra.mxu0 %v889
        %913 = vmatmul.bf16.gmra.mxu0 %v883
        %v914 = vpop.f32.mrf.mxu0
        %v915 = vadd.f32 0.0, %v914
        %v916 = vpop.f32.mrf.mxu0
        %v917 = vadd.f32 0.0, %v916
        %918 = vdwg.mxu0
        %v919 = vadd.f32 %v868, %v901
        %v920 = vadd.f32 %v869, %v915
        %v921 = vadd.f32 %v870, %v903
        %v922 = vadd.f32 %v871, %v917
        %923 = vrot.lane.b32.xlu0 %v607, 127
        %v924 = vpop.permute.xlu0 %923
        %925 = vrot.lane.b32.xlu0 %v608, 127
        %v926 = vpop.permute.xlu0 %925
        %vm927 = vcmp.lt.s32.totalorder %v616, 127
        %v928 = vsel %vm927, %v924, %v926
        %v929 = vsel %vm927, %v926, %v924
        %s930 = scalar_lea.vmem %s13, 5
        %v931 = vld [vmem:[%s930] ss:$8 sm:$0x3]
        %v933 = vperm.slane %v931, 0
        %v934 = vperm.slane %v931, 1
        %v937 = vmul.f32 %v928, %v933
        %v938 = vmul.f32 %v929, %v934
        %v939 = vpack.c.bf16 %v937, %v937
        %v940 = vpack.c.bf16 %v938, %v938
        %s941 = scalar_lea.vmem %s5, 40
        %v942 = vld [vmem:[%s941] sm:$0xf]
        %v943 = vld [vmem:[%s941 + $0x4] sm:$0xf]
        %v946 = vunpack.c.l.b16 %v942
        %v947 = vunpack.c.l.b16 %v943
        %v948 = vpack.c.b16 %v947, %v946
        %v950 = vsel %vm500, %v948, 0
        %v953 = vsel %vm661, %v939, 0
        %v956 = vsel %vm661, %v940, 0
        %958 = vmatpush.bf16.msra.mxu0 0
        %959 = vmatpush.bf16.msra.mxu0 0
        %960 = vmatpush.bf16.msra.mxu0 0
        %961 = vmatpush.bf16.msra.mxu0 0
        %962 = vmatpush.bf16.msra.mxu0 0
        %963 = vmatpush.bf16.msra.mxu0 0
        %964 = vmatpush.bf16.msra.mxu0 0
        %965 = vmatpush.bf16.msra.mxu0 %v953
        %966 = vmatmul.bf16.gmra.mxu0 %v950
        %v967 = vpop.f32.mrf.mxu0
        %v968 = vadd.f32 0.0, %v967
        %v969 = vpop.f32.mrf.mxu0
        %v970 = vadd.f32 0.0, %v969
        %971 = vdwg.mxu0
        %972 = vmatpush.bf16.msra.mxu0 0
        %973 = vmatpush.bf16.msra.mxu0 0
        %974 = vmatpush.bf16.msra.mxu0 0
        %975 = vmatpush.bf16.msra.mxu0 0
        %976 = vmatpush.bf16.msra.mxu0 0
        %977 = vmatpush.bf16.msra.mxu0 0
        %978 = vmatpush.bf16.msra.mxu0 0
        %979 = vmatpush.bf16.msra.mxu0 %v956
        %980 = vmatmul.bf16.gmra.mxu0 %v950
        %v981 = vpop.f32.mrf.mxu0
        %v982 = vadd.f32 0.0, %v981
        %v983 = vpop.f32.mrf.mxu0
        %v984 = vadd.f32 0.0, %v983
        %985 = vdwg.mxu0
        %v986 = vadd.f32 %v919, %v968
        %v987 = vadd.f32 %v920, %v982
        %v988 = vadd.f32 %v921, %v970
        %v989 = vadd.f32 %v922, %v984
        %990 = vrot.lane.b32.xlu0 %v607, 113
        %v991 = vpop.permute.xlu0 %990
        %992 = vrot.lane.b32.xlu0 %v608, 113
        %v993 = vpop.permute.xlu0 %992
        %vm994 = vcmp.lt.s32.totalorder %v616, 113
        %v995 = vsel %vm994, %v991, %v993
        %v996 = vsel %vm994, %v993, %v991
        %s997 = scalar_lea.vmem %s13, 6
        %v998 = vld [vmem:[%s997] ss:$8 sm:$0x3]
        %v1000 = vperm.slane %v998, 0
        %v1001 = vperm.slane %v998, 1
        %v1004 = vmul.f32 %v995, %v1000
        %v1005 = vmul.f32 %v996, %v1001
        %v1006 = vpack.c.bf16 %v1004, %v1004
        %v1007 = vpack.c.bf16 %v1005, %v1005
        %s1008 = scalar_lea.vmem %s5, 48
        %v1009 = vld [vmem:[%s1008] sm:$0xf]
        %v1010 = vld [vmem:[%s1008 + $0x4] sm:$0xf]
        %v1013 = vunpack.c.l.b16 %v1009
        %v1014 = vunpack.c.l.b16 %v1010
        %v1015 = vpack.c.b16 %v1014, %v1013
        %v1017 = vsel %vm500, %v1015, 0
        %v1020 = vsel %vm661, %v1006, 0
        %v1023 = vsel %vm661, %v1007, 0
        %1025 = vmatpush.bf16.msra.mxu0 0
        %1026 = vmatpush.bf16.msra.mxu0 0
        %1027 = vmatpush.bf16.msra.mxu0 0
        %1028 = vmatpush.bf16.msra.mxu0 0
        %1029 = vmatpush.bf16.msra.mxu0 0
        %1030 = vmatpush.bf16.msra.mxu0 0
        %1031 = vmatpush.bf16.msra.mxu0 0
        %1032 = vmatpush.bf16.msra.mxu0 %v1020
        %1033 = vmatmul.bf16.gmra.mxu0 %v1017
        %v1034 = vpop.f32.mrf.mxu0
        %v1035 = vadd.f32 0.0, %v1034
        %v1036 = vpop.f32.mrf.mxu0
        %v1037 = vadd.f32 0.0, %v1036
        %1038 = vdwg.mxu0
        %1039 = vmatpush.bf16.msra.mxu0 0
        %1040 = vmatpush.bf16.msra.mxu0 0
        %1041 = vmatpush.bf16.msra.mxu0 0
        %1042 = vmatpush.bf16.msra.mxu0 0
        %1043 = vmatpush.bf16.msra.mxu0 0
        %1044 = vmatpush.bf16.msra.mxu0 0
        %1045 = vmatpush.bf16.msra.mxu0 0
        %1046 = vmatpush.bf16.msra.mxu0 %v1023
        %1047 = vmatmul.bf16.gmra.mxu0 %v1017
        %v1048 = vpop.f32.mrf.mxu0
        %v1049 = vadd.f32 0.0, %v1048
        %v1050 = vpop.f32.mrf.mxu0
        %v1051 = vadd.f32 0.0, %v1050
        %1052 = vdwg.mxu0
        %v1053 = vadd.f32 %v986, %v1035
        %v1054 = vadd.f32 %v987, %v1049
        %v1055 = vadd.f32 %v988, %v1037
        %v1056 = vadd.f32 %v989, %v1051
        %1057 = vrot.lane.b32.xlu0 %v607, 112
        %v1058 = vpop.permute.xlu0 %1057
        %1059 = vrot.lane.b32.xlu0 %v608, 112
        %v1060 = vpop.permute.xlu0 %1059
        %vm1061 = vcmp.lt.s32.totalorder %v616, 112
        %v1062 = vsel %vm1061, %v1058, %v1060
        %v1063 = vsel %vm1061, %v1060, %v1058
        %s1064 = scalar_lea.vmem %s13, 7
        %v1065 = vld [vmem:[%s1064] ss:$8 sm:$0x3]
        %v1067 = vperm.slane %v1065, 0
        %v1068 = vperm.slane %v1065, 1
        %v1071 = vmul.f32 %v1062, %v1067
        %v1072 = vmul.f32 %v1063, %v1068
        %v1073 = vpack.c.bf16 %v1071, %v1071
        %v1074 = vpack.c.bf16 %v1072, %v1072
        %s1075 = scalar_lea.vmem %s5, 56
        %v1076 = vld [vmem:[%s1075] sm:$0xf]
        %v1077 = vld [vmem:[%s1075 + $0x4] sm:$0xf]
        %v1080 = vunpack.c.l.b16 %v1076
        %v1081 = vunpack.c.l.b16 %v1077
        %v1082 = vpack.c.b16 %v1081, %v1080
        %v1084 = vsel %vm500, %v1082, 0
        %v1087 = vsel %vm661, %v1073, 0
        %v1090 = vsel %vm661, %v1074, 0
        %1092 = vmatpush.bf16.msra.mxu0 0
        %1093 = vmatpush.bf16.msra.mxu0 0
        %1094 = vmatpush.bf16.msra.mxu0 0
        %1095 = vmatpush.bf16.msra.mxu0 0
        %1096 = vmatpush.bf16.msra.mxu0 0
        %1097 = vmatpush.bf16.msra.mxu0 0
        %1098 = vmatpush.bf16.msra.mxu0 0
        %1099 = vmatpush.bf16.msra.mxu0 %v1087
        %1100 = vmatmul.bf16.gmra.mxu0 %v1084
        %v1101 = vpop.f32.mrf.mxu0
        %v1102 = vadd.f32 0.0, %v1101
        %v1103 = vpop.f32.mrf.mxu0
        %v1104 = vadd.f32 0.0, %v1103
        %1105 = vdwg.mxu0
        %1106 = vmatpush.bf16.msra.mxu0 0
        %1107 = vmatpush.bf16.msra.mxu0 0
        %1108 = vmatpush.bf16.msra.mxu0 0
        %1109 = vmatpush.bf16.msra.mxu0 0
        %1110 = vmatpush.bf16.msra.mxu0 0
        %1111 = vmatpush.bf16.msra.mxu0 0
        %1112 = vmatpush.bf16.msra.mxu0 0
        %1113 = vmatpush.bf16.msra.mxu0 %v1090
        %1114 = vmatmul.bf16.gmra.mxu0 %v1084
        %v1115 = vpop.f32.mrf.mxu0
        %v1116 = vadd.f32 0.0, %v1115
        %v1117 = vpop.f32.mrf.mxu0
        %v1118 = vadd.f32 0.0, %v1117
        %1119 = vdwg.mxu0
        %v1120 = vadd.f32 %v1053, %v1102
        %v1121 = vadd.f32 %v1054, %v1116
        %v1122 = vadd.f32 %v1055, %v1104
        %v1123 = vadd.f32 %v1056, %v1118
        %1124 = vrot.lane.b32.xlu0 %v607, 111
        %v1125 = vpop.permute.xlu0 %1124
        %1126 = vrot.lane.b32.xlu0 %v608, 111
        %v1127 = vpop.permute.xlu0 %1126
        %vm1128 = vcmp.lt.s32.totalorder %v616, 111
        %v1129 = vsel %vm1128, %v1125, %v1127
        %v1130 = vsel %vm1128, %v1127, %v1125
        %s1131 = scalar_lea.vmem %s13, 16
        %v1132 = vld [vmem:[%s1131] ss:$8 sm:$0x3]
        %v1134 = vperm.slane %v1132, 0
        %v1135 = vperm.slane %v1132, 1
        %v1138 = vmul.f32 %v1129, %v1134
        %v1139 = vmul.f32 %v1130, %v1135
        %v1140 = vpack.c.bf16 %v1138, %v1138
        %v1141 = vpack.c.bf16 %v1139, %v1139
        %s1142 = scalar_lea.vmem %s5, 64
        %v1143 = vld [vmem:[%s1142] sm:$0xf]
        %v1144 = vld [vmem:[%s1142 + $0x4] sm:$0xf]
        %v1147 = vunpack.c.l.b16 %v1143
        %v1148 = vunpack.c.l.b16 %v1144
        %v1149 = vpack.c.b16 %v1148, %v1147
        %v1151 = vsel %vm500, %v1149, 0
        %v1154 = vsel %vm661, %v1140, 0
        %v1157 = vsel %vm661, %v1141, 0
        %1159 = vmatpush.bf16.msra.mxu0 0
        %1160 = vmatpush.bf16.msra.mxu0 0
        %1161 = vmatpush.bf16.msra.mxu0 0
        %1162 = vmatpush.bf16.msra.mxu0 0
        %1163 = vmatpush.bf16.msra.mxu0 0
        %1164 = vmatpush.bf16.msra.mxu0 0
        %1165 = vmatpush.bf16.msra.mxu0 0
        %1166 = vmatpush.bf16.msra.mxu0 %v1154
        %1167 = vmatmul.bf16.gmra.mxu0 %v1151
        %v1168 = vpop.f32.mrf.mxu0
        %v1169 = vadd.f32 0.0, %v1168
        %v1170 = vpop.f32.mrf.mxu0
        %v1171 = vadd.f32 0.0, %v1170
        %1172 = vdwg.mxu0
        %1173 = vmatpush.bf16.msra.mxu0 0
        %1174 = vmatpush.bf16.msra.mxu0 0
        %1175 = vmatpush.bf16.msra.mxu0 0
        %1176 = vmatpush.bf16.msra.mxu0 0
        %1177 = vmatpush.bf16.msra.mxu0 0
        %1178 = vmatpush.bf16.msra.mxu0 0
        %1179 = vmatpush.bf16.msra.mxu0 0
        %1180 = vmatpush.bf16.msra.mxu0 %v1157
        %1181 = vmatmul.bf16.gmra.mxu0 %v1151
        %v1182 = vpop.f32.mrf.mxu0
        %v1183 = vadd.f32 0.0, %v1182
        %v1184 = vpop.f32.mrf.mxu0
        %v1185 = vadd.f32 0.0, %v1184
        %1186 = vdwg.mxu0
        %v1187 = vadd.f32 %v1120, %v1169
        %v1188 = vadd.f32 %v1121, %v1183
        %v1189 = vadd.f32 %v1122, %v1171
        %v1190 = vadd.f32 %v1123, %v1185
        %1192 = vset.pattern.permute.xlu0 0
        %1193 = vperm.xlu0 %1192, %v609
        %v1194 = vpop.permute.xlu0 %1193
        %1197 = vset.pattern.permute.xlu0 0
        %1198 = vperm.xlu0 %1197, %v610
        %v1199 = vpop.permute.xlu0 %1198
        %v1201 = vadd.f32 %v1187, %v1194
        %v1202 = vadd.f32 %v1188, %v1194
        %v1203 = vadd.f32 %v1189, %v1199
        %v1204 = vadd.f32 %v1190, %v1199
        %v1205 = vld [vmem:[%s485] sm:$0xff]
        %v1206 = vld [vmem:[%s485 + $0x8] sm:$0xff]
        %1208 = vset.pattern.permute.xlu0 0
        %1209 = vperm.xlu0 %1208, %v1205
        %v1210 = vpop.permute.xlu0 %1209
        %1213 = vset.pattern.permute.xlu0 0
        %1214 = vperm.xlu0 %1213, %v1206
        %v1215 = vpop.permute.xlu0 %1214
        %v1217 = vadd.f32 %v1201, %v1210
        %v1218 = vadd.f32 %v1202, %v1210
        %v1219 = vadd.f32 %v1203, %v1215
        %v1220 = vadd.f32 %v1204, %v1215
        %v1221 = vadd.f32 %v1217, %v1218
        %1222 = vadd.xlane.f32.xlu0 %v1221
        %v1223 = vpop.xlane.xlu0 %1222
        %v1224 = vadd.f32 %v1219, %v1220
        %1225 = vadd.xlane.f32.xlu0 %v1224
        %v1226 = vpop.xlane.xlu0 %1225
        %v1227 = vmul.f32 %v1217, %v1217
        %v1228 = vmul.f32 %v1218, %v1218
        %v1229 = vmul.f32 %v1219, %v1219
        %v1230 = vmul.f32 %v1220, %v1220
        %v1231 = vadd.f32 %v1227, %v1228
        %1232 = vadd.xlane.f32.xlu0 %v1231
        %v1233 = vpop.xlane.xlu0 %1232
        %v1234 = vadd.f32 %v1229, %v1230
        %1235 = vadd.xlane.f32.xlu0 %v1234
        %v1236 = vpop.xlane.xlu0 %1235
        %v1237 = vld [vmem:[%s9] sm:$0xff]
        %v1238 = vld [vmem:[%s9 + $0x8] sm:$0xff]
        %v1239 = vsel %vm498, %v1223, %v1233
        %v1240 = vsel %vm498, %v1226, %v1236
        %vm1241 = vcmask 130048
        %v1243 = vsel %vm1241, %v1237, 0
        %v1246 = vsel %vm1241, %v1238, 0
        %1248 = vmatpush.msra.mxu0 0.0
        %1249 = vmatpush.msra.mxu0 0.0
        %1250 = vmatpush.msra.mxu0 0.0
        %1251 = vmatpush.msra.mxu0 0.0
        %1252 = vmatpush.msra.mxu0 0.0
        %1253 = vmatpush.msra.mxu0 0.0
        %1254 = vmatpush.msra.mxu0 0.0
        %1255 = vmatpush.msra.mxu0 0.0
        %1256 = vmatpush.msra.mxu0 0.0
        %1257 = vmatpush.msra.mxu0 0.0
        %1258 = vmatpush.msra.mxu0 0.0
        %1259 = vmatpush.msra.mxu0 0.0
        %1260 = vmatpush.msra.mxu0 0.0
        %1261 = vmatpush.msra.mxu0 0.0
        %1262 = vmatpush.msra.mxu0 %v1240
        %1263 = vmatpush.msra.mxu0 %v1239
        %1264 = vmatmul.f32.gmra.mxu0 %v1243
        %v1265 = vpop.f32.mrf.mxu0
        %v1266 = vadd.f32 0.0, %v1265
        %1267 = vmatmul.f32.gmra.mxu0 %v1246
        %v1268 = vpop.f32.mrf.mxu0
        %v1269 = vadd.f32 0.0, %v1268
        %1270 = vdwg.mxu0
        %v1271 = vmul.f32 %v1266, %v1266
        %v1272 = vmul.f32 %v1269, %v1269
        %1275 = vrot.lane.b32.xlu0 %v1271, 1
        %v1276 = vpop.permute.xlu0 %1275
        %1277 = vrot.lane.b32.xlu0 %v1272, 1
        %v1278 = vpop.permute.xlu0 %1277
        %v1281 = vsub.f32 %v1266, %v1276
        %v1282 = vsub.f32 %v1269, %v1278
        %v1283 = vadd.f32 %v1281, 1e-05
        %v1284 = vadd.f32 %v1282, 1e-05
        %v1285 = vrsqrt.pop %v1283
        %v1286 = vmul.f32 %v1285, %v1283
        %v1287 = vmul.f32 %v1286, %v1285
        %v1288 = vmul.f32 0.5, %v1287
        %v1289 = vsub.f32 1.5, %v1288
        %v1290 = vmul.f32 %v1285, %v1289
        %vm1291 = vweird.f32 %v1283
        %vm1292 = vweird.f32 %v1285
        %vm1293 = vmor %vm1291, %vm1292
        %v1294 = vsel %vm1293, %v1285, %v1290
        %v1295 = vrsqrt.pop %v1284
        %v1296 = vmul.f32 %v1295, %v1284
        %v1297 = vmul.f32 %v1296, %v1295
        %v1298 = vmul.f32 0.5, %v1297
        %v1299 = vsub.f32 1.5, %v1298
        %v1300 = vmul.f32 %v1295, %v1299
        %vm1301 = vweird.f32 %v1284
        %vm1302 = vweird.f32 %v1295
        %vm1303 = vmor %vm1301, %vm1302
        %v1304 = vsel %vm1303, %v1295, %v1300
        %1306 = vset.pattern.permute.xlu0 0
        %1307 = vperm.xlu0 %1306, %v1266
        %v1308 = vpop.permute.xlu0 %1307
        %1311 = vset.pattern.permute.xlu0 0
        %1312 = vperm.xlu0 %1311, %v1269
        %v1313 = vpop.permute.xlu0 %1312
        %v1315 = vsub.f32 %v1217, %v1308
        %v1316 = vsub.f32 %v1218, %v1308
        %v1317 = vsub.f32 %v1219, %v1313
        %v1318 = vsub.f32 %v1220, %v1313
        %v1319 = vld [vmem:[%s7] sm:$0xff]
        %v1320 = vld [vmem:[%s7 + $0x8] sm:$0xff]
        %1323 = vrot.lane.b32.xlu0 %v1319, 1
        %v1324 = vpop.permute.xlu0 %1323
        %1325 = vrot.lane.b32.xlu0 %v1320, 1
        %v1326 = vpop.permute.xlu0 %1325
        %v1329 = vmul.f32 %v1294, %v1324
        %v1330 = vmul.f32 %v1304, %v1326
        %1332 = vset.pattern.permute.xlu0 1
        %1333 = vperm.xlu0 %1332, %v1329
        %v1334 = vpop.permute.xlu0 %1333
        %1337 = vset.pattern.permute.xlu0 1
        %1338 = vperm.xlu0 %1337, %v1330
        %v1339 = vpop.permute.xlu0 %1338
        %v1341 = vmul.f32 %v1315, %v1334
        %v1342 = vmul.f32 %v1316, %v1334
        %v1343 = vmul.f32 %v1317, %v1339
        %v1344 = vmul.f32 %v1318, %v1339
        %v1345 = vld [vmem:[%s8] sm:$0xff]
        %v1346 = vld [vmem:[%s8 + $0x8] sm:$0xff]
        %1348 = vset.pattern.permute.xlu0 0
        %1349 = vperm.xlu0 %1348, %v1345
        %v1350 = vpop.permute.xlu0 %1349
        %1353 = vset.pattern.permute.xlu0 0
        %1354 = vperm.xlu0 %1353, %v1346
        %v1355 = vpop.permute.xlu0 %1354
        %v1357 = vadd.f32 %v1341, %v1350
        %v1358 = vadd.f32 %v1342, %v1350
        %v1359 = vadd.f32 %v1343, %v1355
        %v1360 = vadd.f32 %v1344, %v1355
        %v1361 = vxor.u32 %v1357, 2147483648
        %v1362 = vxor.u32 %v1358, 2147483648
        %v1363 = vxor.u32 %v1359, 2147483648
        %v1364 = vxor.u32 %v1360, 2147483648
        %v1365 = vmul.f32 %v1361, 1.442695
        %v1366 = vpow.pop %v1365
        %v1367 = vmul.f32 %v1362, 1.442695
        %v1368 = vpow.pop %v1367
        %v1369 = vmul.f32 %v1363, 1.442695
        %v1370 = vpow.pop %v1369
        %v1371 = vmul.f32 %v1364, 1.442695
        %v1372 = vpow.pop %v1371
        %v1373 = vadd.f32 %v1366, 1.0
        %v1374 = vadd.f32 %v1368, 1.0
        %v1375 = vadd.f32 %v1370, 1.0
        %v1376 = vadd.f32 %v1372, 1.0
        %v1377 = vrcp.pop %v1373
        %v1378 = vmul.f32 %v1373, %v1377
        %v1379 = vsub.f32 1.0, %v1378
        %v1380 = vmul.f32 %v1377, %v1379
        %v1381 = vadd.f32 %v1377, %v1380
        %vm1382 = vweird.f32 %v1373
        %vm1383 = vweird.f32 %v1377
        %vm1384 = vmor %vm1382, %vm1383
        %v1385 = vsel %vm1384, %v1377, %v1381
        %v1386 = vand.u32 2147483647, %v1373
        %vm1387 = vcmp.eq.f32.partialorder %v1386, 8.507059e+37
        %v1388 = vand.u32 %v1373, 2147483648
        %v1389 = vor.u32 1.1754944e-38, %v1388
        %v1390 = vsel %vm1387, %v1389, %v1385
        %v1391 = vmul.f32 1.0, %v1390
        %v1392 = vrcp.pop %v1374
        %v1393 = vmul.f32 %v1374, %v1392
        %v1394 = vsub.f32 1.0, %v1393
        %v1395 = vmul.f32 %v1392, %v1394
        %v1396 = vadd.f32 %v1392, %v1395
        %vm1397 = vweird.f32 %v1374
        %vm1398 = vweird.f32 %v1392
        %vm1399 = vmor %vm1397, %vm1398
        %v1400 = vsel %vm1399, %v1392, %v1396
        %v1401 = vand.u32 2147483647, %v1374
        %vm1402 = vcmp.eq.f32.partialorder %v1401, 8.507059e+37
        %v1403 = vand.u32 %v1374, 2147483648
        %v1404 = vor.u32 1.1754944e-38, %v1403
        %v1405 = vsel %vm1402, %v1404, %v1400
        %v1406 = vmul.f32 1.0, %v1405
        %v1407 = vrcp.pop %v1375
        %v1408 = vmul.f32 %v1375, %v1407
        %v1409 = vsub.f32 1.0, %v1408
        %v1410 = vmul.f32 %v1407, %v1409
        %v1411 = vadd.f32 %v1407, %v1410
        %vm1412 = vweird.f32 %v1375
        %vm1413 = vweird.f32 %v1407
        %vm1414 = vmor %vm1412, %vm1413
        %v1415 = vsel %vm1414, %v1407, %v1411
        %v1416 = vand.u32 2147483647, %v1375
        %vm1417 = vcmp.eq.f32.partialorder %v1416, 8.507059e+37
        %v1418 = vand.u32 %v1375, 2147483648
        %v1419 = vor.u32 1.1754944e-38, %v1418
        %v1420 = vsel %vm1417, %v1419, %v1415
        %v1421 = vmul.f32 1.0, %v1420
        %v1422 = vrcp.pop %v1376
        %v1423 = vmul.f32 %v1376, %v1422
        %v1424 = vsub.f32 1.0, %v1423
        %v1425 = vmul.f32 %v1422, %v1424
        %v1426 = vadd.f32 %v1422, %v1425
        %vm1427 = vweird.f32 %v1376
        %vm1428 = vweird.f32 %v1422
        %vm1429 = vmor %vm1427, %vm1428
        %v1430 = vsel %vm1429, %v1422, %v1426
        %v1431 = vand.u32 2147483647, %v1376
        %vm1432 = vcmp.eq.f32.partialorder %v1431, 8.507059e+37
        %v1433 = vand.u32 %v1376, 2147483648
        %v1434 = vor.u32 1.1754944e-38, %v1433
        %v1435 = vsel %vm1432, %v1434, %v1430
        %v1436 = vmul.f32 1.0, %v1435
        %v1437 = vmul.f32 %v1357, %v1391
        %v1438 = vmul.f32 %v1358, %v1406
        %v1439 = vmul.f32 %v1359, %v1421
        %v1440 = vmul.f32 %v1360, %v1436
        %v1441 = vld [vmem:[%s12] sm:$0xff]
        %v1442 = vld [vmem:[%s12 + $0x8] sm:$0xff]
        %1443 = vrot.lane.b32.xlu0 %v1437, 17
        %v1444 = vpop.permute.xlu0 %1443
        %1445 = vrot.lane.b32.xlu0 %v1439, 17
        %v1446 = vpop.permute.xlu0 %1445
        %1447 = vrot.lane.b32.xlu0 %v1438, 17
        %v1448 = vpop.permute.xlu0 %1447
        %1449 = vrot.lane.b32.xlu0 %v1440, 17
        %v1450 = vpop.permute.xlu0 %1449
        %v1451 = vsel %vm617, %v1444, %v1448
        %v1452 = vsel %vm617, %v1446, %v1450
        %v1453 = vsel %vm617, %v1448, %v1444
        %v1454 = vsel %vm617, %v1450, %v1446
        %v1455 = vmul.f32 %v1453, %v622
        %v1456 = vmul.f32 %v1451, %v623
        %v1457 = vmul.f32 %v1454, %v622
        %v1458 = vmul.f32 %v1452, %v623
        %v1459 = vpack.c.bf16 %v1457, %v1455
        %v1460 = vpack.c.bf16 %v1458, %v1456
        %v1461 = vld [vmem:[%s10] sm:$0xf]
        %v1462 = vld [vmem:[%s10 + $0x4] sm:$0xf]
        %1463 = vrot.lane.b32.xlu0 %v1437, 16
        %v1464 = vpop.permute.xlu0 %1463
        %1465 = vrot.lane.b32.xlu0 %v1439, 16
        %v1466 = vpop.permute.xlu0 %1465
        %1467 = vrot.lane.b32.xlu0 %v1438, 16
        %v1468 = vpop.permute.xlu0 %1467
        %1469 = vrot.lane.b32.xlu0 %v1440, 16
        %v1470 = vpop.permute.xlu0 %1469
        %v1471 = vsel %vm636, %v1464, %v1468
        %v1472 = vsel %vm636, %v1466, %v1470
        %v1473 = vsel %vm636, %v1468, %v1464
        %v1474 = vsel %vm636, %v1470, %v1466
        %v1475 = vmul.f32 %v1473, %v642
        %v1476 = vmul.f32 %v1471, %v643
        %v1477 = vmul.f32 %v1474, %v642
        %v1478 = vmul.f32 %v1472, %v643
        %v1479 = vpack.c.bf16 %v1477, %v1475
        %v1480 = vpack.c.bf16 %v1478, %v1476
        %s1481 = scalar_lea.vmem %s10, 8
        %v1482 = vld [vmem:[%s1481] sm:$0xf]
        %v1483 = vld [vmem:[%s1481 + $0x4] sm:$0xf]
        %v1486 = vunpack.c.l.b16 %v1482
        %v1487 = vunpack.c.l.b16 %v1483
        %v1488 = vpack.c.b16 %v1487, %v1486
        %v1490 = vsel %vm1241, %v1488, 0
        %1492 = vmatpush.bf16.msra.mxu0 0
        %1493 = vmatpush.bf16.msra.mxu0 0
        %1494 = vmatpush.bf16.msra.mxu0 0
        %1495 = vmatpush.bf16.msra.mxu0 0
        %1496 = vmatpush.bf16.msra.mxu0 0
        %1497 = vmatpush.bf16.msra.mxu0 0
        %1498 = vmatpush.bf16.msra.mxu0 0
        %1499 = vmatpush.bf16.msra.mxu0 %v1479
        %1500 = vmatmul.bf16.gmra.mxu0 %v1490
        %v1501 = vpop.f32.mrf.mxu0
        %v1502 = vadd.f32 0.0, %v1501
        %v1503 = vpop.f32.mrf.mxu0
        %v1504 = vadd.f32 0.0, %v1503
        %1505 = vdwg.mxu0
        %1506 = vmatpush.bf16.msra.mxu0 0
        %1507 = vmatpush.bf16.msra.mxu0 0
        %1508 = vmatpush.bf16.msra.mxu0 0
        %1509 = vmatpush.bf16.msra.mxu0 0
        %1510 = vmatpush.bf16.msra.mxu0 0
        %1511 = vmatpush.bf16.msra.mxu0 0
        %1512 = vmatpush.bf16.msra.mxu0 0
        %1513 = vmatpush.bf16.msra.mxu0 %v1480
        %1514 = vmatmul.bf16.gmra.mxu0 %v1490
        %v1515 = vpop.f32.mrf.mxu0
        %v1516 = vadd.f32 0.0, %v1515
        %v1517 = vpop.f32.mrf.mxu0
        %v1518 = vadd.f32 0.0, %v1517
        %1519 = vdwg.mxu0
        %v1522 = vunpack.c.l.b16 %v1461
        %v1523 = vunpack.c.l.b16 %v1462
        %v1524 = vpack.c.b16 %v1523, %v1522
        %v1526 = vsel %vm1241, %v1524, 0
        %1528 = vmatpush.bf16.msra.mxu0 0
        %1529 = vmatpush.bf16.msra.mxu0 0
        %1530 = vmatpush.bf16.msra.mxu0 0
        %1531 = vmatpush.bf16.msra.mxu0 0
        %1532 = vmatpush.bf16.msra.mxu0 0
        %1533 = vmatpush.bf16.msra.mxu0 0
        %1534 = vmatpush.bf16.msra.mxu0 0
        %1535 = vmatpush.bf16.msra.mxu0 %v1459
        %1536 = vmatmul.bf16.gmra.mxu0 %v1526
        %v1537 = vpop.f32.mrf.mxu0
        %v1538 = vadd.f32 %v1502, %v1537
        %v1539 = vpop.f32.mrf.mxu0
        %v1540 = vadd.f32 %v1504, %v1539
        %1541 = vdwg.mxu0
        %1542 = vmatpush.bf16.msra.mxu0 0
        %1543 = vmatpush.bf16.msra.mxu0 0
        %1544 = vmatpush.bf16.msra.mxu0 0
        %1545 = vmatpush.bf16.msra.mxu0 0
        %1546 = vmatpush.bf16.msra.mxu0 0
        %1547 = vmatpush.bf16.msra.mxu0 0
        %1548 = vmatpush.bf16.msra.mxu0 0
        %1549 = vmatpush.bf16.msra.mxu0 %v1460
        %1550 = vmatmul.bf16.gmra.mxu0 %v1526
        %v1551 = vpop.f32.mrf.mxu0
        %v1552 = vadd.f32 %v1516, %v1551
        %v1553 = vpop.f32.mrf.mxu0
        %v1554 = vadd.f32 %v1518, %v1553
        %1555 = vdwg.mxu0
        %1556 = vrot.lane.b32.xlu0 %v1437, 15
        %v1557 = vpop.permute.xlu0 %1556
        %1558 = vrot.lane.b32.xlu0 %v1439, 15
        %v1559 = vpop.permute.xlu0 %1558
        %1560 = vrot.lane.b32.xlu0 %v1438, 15
        %v1561 = vpop.permute.xlu0 %1560
        %1562 = vrot.lane.b32.xlu0 %v1440, 15
        %v1563 = vpop.permute.xlu0 %1562
        %v1564 = vsel %vm742, %v1557, %v1561
        %v1565 = vsel %vm742, %v1559, %v1563
        %v1566 = vsel %vm742, %v1561, %v1557
        %v1567 = vsel %vm742, %v1563, %v1559
        %v1568 = vmul.f32 %v1566, %v748
        %v1569 = vmul.f32 %v1564, %v749
        %v1570 = vmul.f32 %v1567, %v748
        %v1571 = vmul.f32 %v1565, %v749
        %v1572 = vpack.c.bf16 %v1570, %v1568
        %v1573 = vpack.c.bf16 %v1571, %v1569
        %s1574 = scalar_lea.vmem %s10, 16
        %v1575 = vld [vmem:[%s1574] sm:$0xf]
        %v1576 = vld [vmem:[%s1574 + $0x4] sm:$0xf]
        %v1579 = vunpack.c.l.b16 %v1575
        %v1580 = vunpack.c.l.b16 %v1576
        %v1581 = vpack.c.b16 %v1580, %v1579
        %v1583 = vsel %vm1241, %v1581, 0
        %1585 = vmatpush.bf16.msra.mxu0 0
        %1586 = vmatpush.bf16.msra.mxu0 0
        %1587 = vmatpush.bf16.msra.mxu0 0
        %1588 = vmatpush.bf16.msra.mxu0 0
        %1589 = vmatpush.bf16.msra.mxu0 0
        %1590 = vmatpush.bf16.msra.mxu0 0
        %1591 = vmatpush.bf16.msra.mxu0 0
        %1592 = vmatpush.bf16.msra.mxu0 %v1572
        %1593 = vmatmul.bf16.gmra.mxu0 %v1583
        %v1594 = vpop.f32.mrf.mxu0
        %v1595 = vadd.f32 0.0, %v1594
        %v1596 = vpop.f32.mrf.mxu0
        %v1597 = vadd.f32 0.0, %v1596
        %1598 = vdwg.mxu0
        %1599 = vmatpush.bf16.msra.mxu0 0
        %1600 = vmatpush.bf16.msra.mxu0 0
        %1601 = vmatpush.bf16.msra.mxu0 0
        %1602 = vmatpush.bf16.msra.mxu0 0
        %1603 = vmatpush.bf16.msra.mxu0 0
        %1604 = vmatpush.bf16.msra.mxu0 0
        %1605 = vmatpush.bf16.msra.mxu0 0
        %1606 = vmatpush.bf16.msra.mxu0 %v1573
        %1607 = vmatmul.bf16.gmra.mxu0 %v1583
        %v1608 = vpop.f32.mrf.mxu0
        %v1609 = vadd.f32 0.0, %v1608
        %v1610 = vpop.f32.mrf.mxu0
        %v1611 = vadd.f32 0.0, %v1610
        %1612 = vdwg.mxu0
        %v1613 = vadd.f32 %v1538, %v1595
        %v1614 = vadd.f32 %v1552, %v1609
        %v1615 = vadd.f32 %v1540, %v1597
        %v1616 = vadd.f32 %v1554, %v1611
        %1617 = vrot.lane.b32.xlu0 %v1437, 1
        %v1618 = vpop.permute.xlu0 %1617
        %1619 = vrot.lane.b32.xlu0 %v1439, 1
        %v1620 = vpop.permute.xlu0 %1619
        %1621 = vrot.lane.b32.xlu0 %v1438, 1
        %v1622 = vpop.permute.xlu0 %1621
        %1623 = vrot.lane.b32.xlu0 %v1440, 1
        %v1624 = vpop.permute.xlu0 %1623
        %v1625 = vsel %vm809, %v1618, %v1622
        %v1626 = vsel %vm809, %v1620, %v1624
        %v1627 = vsel %vm809, %v1622, %v1618
        %v1628 = vsel %vm809, %v1624, %v1620
        %v1629 = vmul.f32 %v1627, %v815
        %v1630 = vmul.f32 %v1625, %v816
        %v1631 = vmul.f32 %v1628, %v815
        %v1632 = vmul.f32 %v1626, %v816
        %v1633 = vpack.c.bf16 %v1631, %v1629
        %v1634 = vpack.c.bf16 %v1632, %v1630
        %s1635 = scalar_lea.vmem %s10, 24
        %v1636 = vld [vmem:[%s1635] sm:$0xf]
        %v1637 = vld [vmem:[%s1635 + $0x4] sm:$0xf]
        %v1640 = vunpack.c.l.b16 %v1636
        %v1641 = vunpack.c.l.b16 %v1637
        %v1642 = vpack.c.b16 %v1641, %v1640
        %v1644 = vsel %vm1241, %v1642, 0
        %1646 = vmatpush.bf16.msra.mxu0 0
        %1647 = vmatpush.bf16.msra.mxu0 0
        %1648 = vmatpush.bf16.msra.mxu0 0
        %1649 = vmatpush.bf16.msra.mxu0 0
        %1650 = vmatpush.bf16.msra.mxu0 0
        %1651 = vmatpush.bf16.msra.mxu0 0
        %1652 = vmatpush.bf16.msra.mxu0 0
        %1653 = vmatpush.bf16.msra.mxu0 %v1633
        %1654 = vmatmul.bf16.gmra.mxu0 %v1644
        %v1655 = vpop.f32.mrf.mxu0
        %v1656 = vadd.f32 0.0, %v1655
        %v1657 = vpop.f32.mrf.mxu0
        %v1658 = vadd.f32 0.0, %v1657
        %1659 = vdwg.mxu0
        %1660 = vmatpush.bf16.msra.mxu0 0
        %1661 = vmatpush.bf16.msra.mxu0 0
        %1662 = vmatpush.bf16.msra.mxu0 0
        %1663 = vmatpush.bf16.msra.mxu0 0
        %1664 = vmatpush.bf16.msra.mxu0 0
        %1665 = vmatpush.bf16.msra.mxu0 0
        %1666 = vmatpush.bf16.msra.mxu0 0
        %1667 = vmatpush.bf16.msra.mxu0 %v1634
        %1668 = vmatmul.bf16.gmra.mxu0 %v1644
        %v1669 = vpop.f32.mrf.mxu0
        %v1670 = vadd.f32 0.0, %v1669
        %v1671 = vpop.f32.mrf.mxu0
        %v1672 = vadd.f32 0.0, %v1671
        %1673 = vdwg.mxu0
        %v1674 = vadd.f32 %v1613, %v1656
        %v1675 = vadd.f32 %v1614, %v1670
        %v1676 = vadd.f32 %v1615, %v1658
        %v1677 = vadd.f32 %v1616, %v1672
        %v1678 = vpack.c.bf16 %v1439, %v1437
        %v1679 = vpack.c.bf16 %v1440, %v1438
        %s1680 = scalar_lea.vmem %s10, 32
        %v1681 = vld [vmem:[%s1680] sm:$0xf]
        %v1682 = vld [vmem:[%s1680 + $0x4] sm:$0xf]
        %v1685 = vunpack.c.l.b16 %v1681
        %v1686 = vunpack.c.l.b16 %v1682
        %v1687 = vpack.c.b16 %v1686, %v1685
        %v1689 = vsel %vm1241, %v1687, 0
        %1691 = vmatpush.bf16.msra.mxu0 0
        %1692 = vmatpush.bf16.msra.mxu0 0
        %1693 = vmatpush.bf16.msra.mxu0 0
        %1694 = vmatpush.bf16.msra.mxu0 0
        %1695 = vmatpush.bf16.msra.mxu0 0
        %1696 = vmatpush.bf16.msra.mxu0 0
        %1697 = vmatpush.bf16.msra.mxu0 0
        %1698 = vmatpush.bf16.msra.mxu0 %v1678
        %1699 = vmatmul.bf16.gmra.mxu0 %v1689
        %v1700 = vpop.f32.mrf.mxu0
        %v1701 = vadd.f32 0.0, %v1700
        %v1702 = vpop.f32.mrf.mxu0
        %v1703 = vadd.f32 0.0, %v1702
        %1704 = vdwg.mxu0
        %1705 = vmatpush.bf16.msra.mxu0 0
        %1706 = vmatpush.bf16.msra.mxu0 0
        %1707 = vmatpush.bf16.msra.mxu0 0
        %1708 = vmatpush.bf16.msra.mxu0 0
        %1709 = vmatpush.bf16.msra.mxu0 0
        %1710 = vmatpush.bf16.msra.mxu0 0
        %1711 = vmatpush.bf16.msra.mxu0 0
        %1712 = vmatpush.bf16.msra.mxu0 %v1679
        %1713 = vmatmul.bf16.gmra.mxu0 %v1689
        %v1714 = vpop.f32.mrf.mxu0
        %v1715 = vadd.f32 0.0, %v1714
        %v1716 = vpop.f32.mrf.mxu0
        %v1717 = vadd.f32 0.0, %v1716
        %1718 = vdwg.mxu0
        %v1719 = vadd.f32 %v1674, %v1701
        %v1720 = vadd.f32 %v1675, %v1715
        %v1721 = vadd.f32 %v1676, %v1703
        %v1722 = vadd.f32 %v1677, %v1717
        %1723 = vrot.lane.b32.xlu0 %v1437, 127
        %v1724 = vpop.permute.xlu0 %1723
        %1725 = vrot.lane.b32.xlu0 %v1439, 127
        %v1726 = vpop.permute.xlu0 %1725
        %1727 = vrot.lane.b32.xlu0 %v1438, 127
        %v1728 = vpop.permute.xlu0 %1727
        %1729 = vrot.lane.b32.xlu0 %v1440, 127
        %v1730 = vpop.permute.xlu0 %1729
        %v1731 = vsel %vm927, %v1724, %v1728
        %v1732 = vsel %vm927, %v1726, %v1730
        %v1733 = vsel %vm927, %v1728, %v1724
        %v1734 = vsel %vm927, %v1730, %v1726
        %v1735 = vmul.f32 %v1731, %v933
        %v1736 = vmul.f32 %v1733, %v934
        %v1737 = vmul.f32 %v1732, %v933
        %v1738 = vmul.f32 %v1734, %v934
        %v1739 = vpack.c.bf16 %v1737, %v1735
        %v1740 = vpack.c.bf16 %v1738, %v1736
        %s1741 = scalar_lea.vmem %s10, 40
        %v1742 = vld [vmem:[%s1741] sm:$0xf]
        %v1743 = vld [vmem:[%s1741 + $0x4] sm:$0xf]
        %v1746 = vunpack.c.l.b16 %v1742
        %v1747 = vunpack.c.l.b16 %v1743
        %v1748 = vpack.c.b16 %v1747, %v1746
        %v1750 = vsel %vm1241, %v1748, 0
        %1752 = vmatpush.bf16.msra.mxu0 0
        %1753 = vmatpush.bf16.msra.mxu0 0
        %1754 = vmatpush.bf16.msra.mxu0 0
        %1755 = vmatpush.bf16.msra.mxu0 0
        %1756 = vmatpush.bf16.msra.mxu0 0
        %1757 = vmatpush.bf16.msra.mxu0 0
        %1758 = vmatpush.bf16.msra.mxu0 0
        %1759 = vmatpush.bf16.msra.mxu0 %v1739
        %1760 = vmatmul.bf16.gmra.mxu0 %v1750
        %v1761 = vpop.f32.mrf.mxu0
        %v1762 = vadd.f32 0.0, %v1761
        %v1763 = vpop.f32.mrf.mxu0
        %v1764 = vadd.f32 0.0, %v1763
        %1765 = vdwg.mxu0
        %1766 = vmatpush.bf16.msra.mxu0 0
        %1767 = vmatpush.bf16.msra.mxu0 0
        %1768 = vmatpush.bf16.msra.mxu0 0
        %1769 = vmatpush.bf16.msra.mxu0 0
        %1770 = vmatpush.bf16.msra.mxu0 0
        %1771 = vmatpush.bf16.msra.mxu0 0
        %1772 = vmatpush.bf16.msra.mxu0 0
        %1773 = vmatpush.bf16.msra.mxu0 %v1740
        %1774 = vmatmul.bf16.gmra.mxu0 %v1750
        %v1775 = vpop.f32.mrf.mxu0
        %v1776 = vadd.f32 0.0, %v1775
        %v1777 = vpop.f32.mrf.mxu0
        %v1778 = vadd.f32 0.0, %v1777
        %1779 = vdwg.mxu0
        %v1780 = vadd.f32 %v1719, %v1762
        %v1781 = vadd.f32 %v1720, %v1776
        %v1782 = vadd.f32 %v1721, %v1764
        %v1783 = vadd.f32 %v1722, %v1778
        %1784 = vrot.lane.b32.xlu0 %v1437, 113
        %v1785 = vpop.permute.xlu0 %1784
        %1786 = vrot.lane.b32.xlu0 %v1439, 113
        %v1787 = vpop.permute.xlu0 %1786
        %1788 = vrot.lane.b32.xlu0 %v1438, 113
        %v1789 = vpop.permute.xlu0 %1788
        %1790 = vrot.lane.b32.xlu0 %v1440, 113
        %v1791 = vpop.permute.xlu0 %1790
        %v1792 = vsel %vm994, %v1785, %v1789
        %v1793 = vsel %vm994, %v1787, %v1791
        %v1794 = vsel %vm994, %v1789, %v1785
        %v1795 = vsel %vm994, %v1791, %v1787
        %v1796 = vmul.f32 %v1792, %v1000
        %v1797 = vmul.f32 %v1794, %v1001
        %v1798 = vmul.f32 %v1793, %v1000
        %v1799 = vmul.f32 %v1795, %v1001
        %v1800 = vpack.c.bf16 %v1798, %v1796
        %v1801 = vpack.c.bf16 %v1799, %v1797
        %s1802 = scalar_lea.vmem %s10, 48
        %v1803 = vld [vmem:[%s1802] sm:$0xf]
        %v1804 = vld [vmem:[%s1802 + $0x4] sm:$0xf]
        %v1807 = vunpack.c.l.b16 %v1803
        %v1808 = vunpack.c.l.b16 %v1804
        %v1809 = vpack.c.b16 %v1808, %v1807
        %v1811 = vsel %vm1241, %v1809, 0
        %1813 = vmatpush.bf16.msra.mxu0 0
        %1814 = vmatpush.bf16.msra.mxu0 0
        %1815 = vmatpush.bf16.msra.mxu0 0
        %1816 = vmatpush.bf16.msra.mxu0 0
        %1817 = vmatpush.bf16.msra.mxu0 0
        %1818 = vmatpush.bf16.msra.mxu0 0
        %1819 = vmatpush.bf16.msra.mxu0 0
        %1820 = vmatpush.bf16.msra.mxu0 %v1800
        %1821 = vmatmul.bf16.gmra.mxu0 %v1811
        %v1822 = vpop.f32.mrf.mxu0
        %v1823 = vadd.f32 0.0, %v1822
        %v1824 = vpop.f32.mrf.mxu0
        %v1825 = vadd.f32 0.0, %v1824
        %1826 = vdwg.mxu0
        %1827 = vmatpush.bf16.msra.mxu0 0
        %1828 = vmatpush.bf16.msra.mxu0 0
        %1829 = vmatpush.bf16.msra.mxu0 0
        %1830 = vmatpush.bf16.msra.mxu0 0
        %1831 = vmatpush.bf16.msra.mxu0 0
        %1832 = vmatpush.bf16.msra.mxu0 0
        %1833 = vmatpush.bf16.msra.mxu0 0
        %1834 = vmatpush.bf16.msra.mxu0 %v1801
        %1835 = vmatmul.bf16.gmra.mxu0 %v1811
        %v1836 = vpop.f32.mrf.mxu0
        %v1837 = vadd.f32 0.0, %v1836
        %v1838 = vpop.f32.mrf.mxu0
        %v1839 = vadd.f32 0.0, %v1838
        %1840 = vdwg.mxu0
        %v1841 = vadd.f32 %v1780, %v1823
        %v1842 = vadd.f32 %v1781, %v1837
        %v1843 = vadd.f32 %v1782, %v1825
        %v1844 = vadd.f32 %v1783, %v1839
        %1845 = vrot.lane.b32.xlu0 %v1437, 112
        %v1846 = vpop.permute.xlu0 %1845
        %1847 = vrot.lane.b32.xlu0 %v1439, 112
        %v1848 = vpop.permute.xlu0 %1847
        %1849 = vrot.lane.b32.xlu0 %v1438, 112
        %v1850 = vpop.permute.xlu0 %1849
        %1851 = vrot.lane.b32.xlu0 %v1440, 112
        %v1852 = vpop.permute.xlu0 %1851
        %v1853 = vsel %vm1061, %v1846, %v1850
        %v1854 = vsel %vm1061, %v1848, %v1852
        %v1855 = vsel %vm1061, %v1850, %v1846
        %v1856 = vsel %vm1061, %v1852, %v1848
        %v1857 = vmul.f32 %v1853, %v1067
        %v1858 = vmul.f32 %v1855, %v1068
        %v1859 = vmul.f32 %v1854, %v1067
        %v1860 = vmul.f32 %v1856, %v1068
        %v1861 = vpack.c.bf16 %v1859, %v1857
        %v1862 = vpack.c.bf16 %v1860, %v1858
        %s1863 = scalar_lea.vmem %s10, 56
        %v1864 = vld [vmem:[%s1863] sm:$0xf]
        %v1865 = vld [vmem:[%s1863 + $0x4] sm:$0xf]
        %v1868 = vunpack.c.l.b16 %v1864
        %v1869 = vunpack.c.l.b16 %v1865
        %v1870 = vpack.c.b16 %v1869, %v1868
        %v1872 = vsel %vm1241, %v1870, 0
        %1874 = vmatpush.bf16.msra.mxu0 0
        %1875 = vmatpush.bf16.msra.mxu0 0
        %1876 = vmatpush.bf16.msra.mxu0 0
        %1877 = vmatpush.bf16.msra.mxu0 0
        %1878 = vmatpush.bf16.msra.mxu0 0
        %1879 = vmatpush.bf16.msra.mxu0 0
        %1880 = vmatpush.bf16.msra.mxu0 0
        %1881 = vmatpush.bf16.msra.mxu0 %v1861
        %1882 = vmatmul.bf16.gmra.mxu0 %v1872
        %v1883 = vpop.f32.mrf.mxu0
        %v1884 = vadd.f32 0.0, %v1883
        %v1885 = vpop.f32.mrf.mxu0
        %v1886 = vadd.f32 0.0, %v1885
        %1887 = vdwg.mxu0
        %1888 = vmatpush.bf16.msra.mxu0 0
        %1889 = vmatpush.bf16.msra.mxu0 0
        %1890 = vmatpush.bf16.msra.mxu0 0
        %1891 = vmatpush.bf16.msra.mxu0 0
        %1892 = vmatpush.bf16.msra.mxu0 0
        %1893 = vmatpush.bf16.msra.mxu0 0
        %1894 = vmatpush.bf16.msra.mxu0 0
        %1895 = vmatpush.bf16.msra.mxu0 %v1862
        %1896 = vmatmul.bf16.gmra.mxu0 %v1872
        %v1897 = vpop.f32.mrf.mxu0
        %v1898 = vadd.f32 0.0, %v1897
        %v1899 = vpop.f32.mrf.mxu0
        %v1900 = vadd.f32 0.0, %v1899
        %1901 = vdwg.mxu0
        %v1902 = vadd.f32 %v1841, %v1884
        %v1903 = vadd.f32 %v1842, %v1898
        %v1904 = vadd.f32 %v1843, %v1886
        %v1905 = vadd.f32 %v1844, %v1900
        %1906 = vrot.lane.b32.xlu0 %v1437, 111
        %v1907 = vpop.permute.xlu0 %1906
        %1908 = vrot.lane.b32.xlu0 %v1439, 111
        %v1909 = vpop.permute.xlu0 %1908
        %1910 = vrot.lane.b32.xlu0 %v1438, 111
        %v1911 = vpop.permute.xlu0 %1910
        %1912 = vrot.lane.b32.xlu0 %v1440, 111
        %v1913 = vpop.permute.xlu0 %1912
        %v1914 = vsel %vm1128, %v1907, %v1911
        %v1915 = vsel %vm1128, %v1909, %v1913
        %v1916 = vsel %vm1128, %v1911, %v1907
        %v1917 = vsel %vm1128, %v1913, %v1909
        %v1918 = vmul.f32 %v1914, %v1134
        %v1919 = vmul.f32 %v1916, %v1135
        %v1920 = vmul.f32 %v1915, %v1134
        %v1921 = vmul.f32 %v1917, %v1135
        %v1922 = vpack.c.bf16 %v1920, %v1918
        %v1923 = vpack.c.bf16 %v1921, %v1919
        %s1924 = scalar_lea.vmem %s10, 64
        %v1925 = vld [vmem:[%s1924] sm:$0xf]
        %v1926 = vld [vmem:[%s1924 + $0x4] sm:$0xf]
        %v1929 = vunpack.c.l.b16 %v1925
        %v1930 = vunpack.c.l.b16 %v1926
        %v1931 = vpack.c.b16 %v1930, %v1929
        %v1933 = vsel %vm1241, %v1931, 0
        %1935 = vmatpush.bf16.msra.mxu0 0
        %1936 = vmatpush.bf16.msra.mxu0 0
        %1937 = vmatpush.bf16.msra.mxu0 0
        %1938 = vmatpush.bf16.msra.mxu0 0
        %1939 = vmatpush.bf16.msra.mxu0 0
        %1940 = vmatpush.bf16.msra.mxu0 0
        %1941 = vmatpush.bf16.msra.mxu0 0
        %1942 = vmatpush.bf16.msra.mxu0 %v1922
        %1943 = vmatmul.bf16.gmra.mxu0 %v1933
        %v1944 = vpop.f32.mrf.mxu0
        %v1945 = vadd.f32 0.0, %v1944
        %v1946 = vpop.f32.mrf.mxu0
        %v1947 = vadd.f32 0.0, %v1946
        %1948 = vdwg.mxu0
        %1949 = vmatpush.bf16.msra.mxu0 0
        %1950 = vmatpush.bf16.msra.mxu0 0
        %1951 = vmatpush.bf16.msra.mxu0 0
        %1952 = vmatpush.bf16.msra.mxu0 0
        %1953 = vmatpush.bf16.msra.mxu0 0
        %1954 = vmatpush.bf16.msra.mxu0 0
        %1955 = vmatpush.bf16.msra.mxu0 0
        %1956 = vmatpush.bf16.msra.mxu0 %v1923
        %1957 = vmatmul.bf16.gmra.mxu0 %v1933
        %v1958 = vpop.f32.mrf.mxu0
        %v1959 = vadd.f32 0.0, %v1958
        %v1960 = vpop.f32.mrf.mxu0
        %v1961 = vadd.f32 0.0, %v1960
        %1962 = vdwg.mxu0
        %v1963 = vadd.f32 %v1902, %v1945
        %v1964 = vadd.f32 %v1903, %v1959
        %v1965 = vadd.f32 %v1904, %v1947
        %v1966 = vadd.f32 %v1905, %v1961
        %v1967 = vld [vmem:[%s11] sm:$0xf]
        %v1968 = vld [vmem:[%s11 + $0x4] sm:$0xf]
        %v1969 = vpack.c.bf16 %v487, %v487
        %v1970 = vpack.c.bf16 %v488, %v488
        %v1973 = vunpack.c.l.b16 %v1967
        %v1974 = vunpack.c.l.b16 %v1968
        %v1975 = vpack.c.b16 %v1974, %v1973
        %v1977 = vsel %vm500, %v1975, 0
        %v1980 = vsel %vm661, %v1969, 0
        %v1983 = vsel %vm661, %v1970, 0
        %1985 = vmatpush.bf16.msra.mxu0 0
        %1986 = vmatpush.bf16.msra.mxu0 0
        %1987 = vmatpush.bf16.msra.mxu0 0
        %1988 = vmatpush.bf16.msra.mxu0 0
        %1989 = vmatpush.bf16.msra.mxu0 0
        %1990 = vmatpush.bf16.msra.mxu0 0
        %1991 = vmatpush.bf16.msra.mxu0 0
        %1992 = vmatpush.bf16.msra.mxu0 %v1980
        %1993 = vmatmul.bf16.gmra.mxu0 %v1977
        %v1994 = vpop.f32.mrf.mxu0
        %v1995 = vadd.f32 0.0, %v1994
        %v1996 = vpop.f32.mrf.mxu0
        %v1997 = vadd.f32 0.0, %v1996
        %1998 = vdwg.mxu0
        %1999 = vmatpush.bf16.msra.mxu0 0
        %2000 = vmatpush.bf16.msra.mxu0 0
        %2001 = vmatpush.bf16.msra.mxu0 0
        %2002 = vmatpush.bf16.msra.mxu0 0
        %2003 = vmatpush.bf16.msra.mxu0 0
        %2004 = vmatpush.bf16.msra.mxu0 0
        %2005 = vmatpush.bf16.msra.mxu0 0
        %2006 = vmatpush.bf16.msra.mxu0 %v1983
        %2007 = vmatmul.bf16.gmra.mxu0 %v1977
        %v2008 = vpop.f32.mrf.mxu0
        %v2009 = vadd.f32 0.0, %v2008
        %v2010 = vpop.f32.mrf.mxu0
        %v2011 = vadd.f32 0.0, %v2010
        %2012 = vdwg.mxu0
        %v2013 = vadd.f32 %v1963, %v1995
        %v2014 = vadd.f32 %v1964, %v2009
        %v2015 = vadd.f32 %v1965, %v1997
        %v2016 = vadd.f32 %v1966, %v2011
        %2018 = vset.pattern.permute.xlu0 0
        %2019 = vperm.xlu0 %2018, %v1441
        %v2020 = vpop.permute.xlu0 %2019
        %2023 = vset.pattern.permute.xlu0 0
        %2024 = vperm.xlu0 %2023, %v1442
        %v2025 = vpop.permute.xlu0 %2024
        %v2027 = vadd.f32 %v2013, %v2020
        %v2028 = vadd.f32 %v2014, %v2020
        %v2029 = vadd.f32 %v2015, %v2025
        %v2030 = vadd.f32 %v2016, %v2025
        %2031 = vst [vmem:[%s475] sm:$0xff] %v2027
        %2032 = vst [vmem:[%s475 + $0x8] sm:$0xff] %v2028
        %2033 = vst [vmem:[%s475 + $0x10] sm:$0xff] %v2029
        %2034 = vst [vmem:[%s475 + $0x18] sm:$0xff] %v2030
        %s2035 = sand.u32 %s340, 1
        %s2036 = scalar_lea.sflag [#allocation3], %s2035
        %s2037 = sand.u32 %s340, 1
        %s2038 = smul.addr %s2037, 32
        %s2039 = scalar_lea.vmem [#allocation2], %s2038
        // Predicated region
        $region77: #{tpu_custom_call.1} parent=75 // pred_check
          %p2040 = pneg %p350
        $region78: #{tpu_custom_call.1} parent=75 // pred_check_branch
          %2042 = sbr.rel (%p2040) target = $region80
        $region79: #{tpu_custom_call.1} parent=75 // pred_region
          %2044 = vsyncadd %s2036, 0
          %s2045 = smul.addr %s28, 4
          %s2046 = smul.addr %s2045, 8
          %s2047 = scalar_lea.hbm %s14, %s2046
          %s2048 = sshll.u32 %s2039, 4
          %s2049 = int_to_ptr.vmem [resolvable:$true] %s2048
          %s2050 = sshll.u32 %s2047, 4
          %s2051 = int_to_ptr.hbm [resolvable:$true] %s2050
          %2056 = dma.vmem_to_hbm [thread:$0]  %s2049, 512, %s2051, %s2036, 256, 256, 16
        $region80: #{tpu_custom_call.1} parent=75 // pred_fallthru
          _
      $region76: #{tpu_custom_call.1} parent=5 // pred_fallthru
        _
      %p2057 = scmp.le.s32.totalorder 2, %s23
      // Predicated region
      $region81: #{tpu_custom_call.1} parent=5 // pred_check
        %p2058 = pneg %p2057
      $region82: #{tpu_custom_call.1} parent=5 // pred_check_branch
        %2060 = sbr.rel (%p2058) target = $region84
      $region83: #{tpu_custom_call.1} parent=5 // pred_region
        %s2061 = ssub.s32 %s23, 2
        // Predicated region
        $region85: #{tpu_custom_call.1} parent=83 // pred_check
          %p2062 = pneg %p356
        $region86: #{tpu_custom_call.1} parent=83 // pred_check_branch
          %2064 = sbr.rel (%p2062) target = $region88
        $region87: #{tpu_custom_call.1} parent=83 // pred_region
          %s2065 = sand.u32 %s341, 1
          %s2066 = scalar_lea.sflag [#allocation3], %s2065
          %s2067 = sand.u32 %s341, 1
          %s2068 = smul.addr %s2067, 32
          %s2069 = scalar_lea.vmem [#allocation2], %s2068
          %2071 = dma.done %s2066, 512
        $region88: #{tpu_custom_call.1} parent=83 // pred_fallthru
          _
      $region84: #{tpu_custom_call.1} parent=5 // pred_fallthru
        _
    $region6: #{tpu_custom_call.1} parent=1 // loop_footer
      %s27 = sadd.s32 1, %s23
    $region7: #{tpu_custom_call.1} parent=1 // loop_footer_branch
      %22 = sbr.rel target = $region3
    $region8: #{tpu_custom_call.1} parent=1 // loop_exit
      _
    %2072 = vsyncpa [#allocation3], 1
    %s2073 = scalar_lea.sflag [#allocation3], 1
    %2074 = vsyncpa %s2073, 1

</llo_original>
